<compile_context>
chip_gen: v6e
topology: v6e:2x2x1
jax: 0.10.0
libtpu: 0.0.40
codegen_flags: <defaults>
</compile_context>

<pallas_src>
import math
import functools

import jax
import jax.numpy as jnp
from jax.experimental import pallas as pl
from jax.experimental.pallas import tpu as pltpu


def _cond_gru_kernel(gi_ref, peep_ref, h0_ref, wh_ref, bh_ref,
                     out_ref, hlast_ref, h_scratch, *, tc, hidden_dim):
    """One grid step == one chunk of `tc` GRU time steps."""
    c = pl.program_id(0)
    H = hidden_dim

    @pl.when(c == 0)
    def _():
        h_scratch[...] = h0_ref[...].astype(jnp.float32)

    # Time-invariant operands: load once per chunk.
    peep = peep_ref[...]                                   # (B, 3H) f32, includes bp
    p_r, p_i, p_n = peep[:, :H], peep[:, H:2 * H], peep[:, 2 * H:]
    wh = wh_ref[...]                                       # (H, 3H)  (f32 or bf16)
    bh = bh_ref[...]                                       # (1, 3H) f32

    h = h_scratch[...]                                     # (B, H) f32 carried state
    for j in range(tc):                                    # static (unrolled) time loop
        ig = gi_ref[j]                                     # (B, 3H) f32, includes bi
        hg = jnp.dot(h.astype(wh.dtype), wh,
                     preferred_element_type=jnp.float32) + bh   # (B, 3H) f32
        i_r, i_i, i_n = ig[:, :H], ig[:, H:2 * H], ig[:, 2 * H:]
        h_r, h_i, h_n = hg[:, :H], hg[:, H:2 * H], hg[:, 2 * H:]
        resetgate = jax.nn.sigmoid(i_r + h_r + p_r)
        inputgate = jax.nn.sigmoid(i_i + h_i + p_i)
        newgate = jnp.tanh(i_n + resetgate * h_n + p_n)
        h = newgate + inputgate * (h - newgate)            # (B, H)
        out_ref[:, j, :] = h.astype(out_ref.dtype)         # batch-major chunk slab

    h_scratch[...] = h

    @pl.when(c == pl.num_programs(0) - 1)
    def _():
        hlast_ref[...] = h.astype(hlast_ref.dtype)


def _pick_time_chunk(T, target=32):
    """Largest divisor of T that is <= target and sublane-friendly (mult of 8 or == T)."""
    for d in range(min(target, T), 0, -1):
        if T % d == 0 and (d % 8 == 0 or d == T):
            return d
    return T   # single chunk fallback (block dims equal full dims -> always legal)


@functools.partial(jax.jit, static_argnames=("time_chunk", "matmul_dtype"))
def conditional_gru(x, h0, ctx, params, *, time_chunk=None, matmul_dtype=None):
    """x: (B, T, D)  h0: (B, H)  ctx: (B, H) -> (output (B, T, H), hidden (B, H))."""
    B, T, D = x.shape
    H = h0.shape[-1]
    out_dtype = x.dtype
    mm_dtype = jnp.dtype(matmul_dtype) if matmul_dtype is not None else jnp.dtype(x.dtype)

    # --- time chunking (static) ---
    if (time_chunk is not None and T % time_chunk == 0
            and (time_chunk % 8 == 0 or time_chunk == T)):
        tc = int(time_chunk)
    else:
        tc = _pick_time_chunk(T)
    num_chunks = T // tc

    # --- pad batch to sublane granularity (8); padded rows are sliced off at the end ---
    Bp = ((B + 7) // 8) * 8
    if Bp != B:
        pad = Bp - B
        x = jnp.pad(x, ((0, pad), (0, 0), (0, 0)))
        h0 = jnp.pad(h0, ((0, pad), (0, 0)))
        ctx = jnp.pad(ctx, ((0, pad), (0, 0)))

    # nn.Linear computes x @ W^T + b; pre-transpose weights so matmuls are x @ W.
    wi_t = params["w_in"].T.astype(mm_dtype)       # (D, 3H)
    wh_t = params["w_hid"].T.astype(mm_dtype)      # (H, 3H)   -> stays in the kernel
    wp_t = params["w_peep"].T.astype(mm_dtype)     # (H, 3H)
    bi = params["b_in"].astype(jnp.float32)        # (3H,)
    bh = params["b_hid"].reshape(1, 3 * H).astype(jnp.float32)
    bp = params["b_peep"].astype(jnp.float32)      # (3H,)

    # Hoisted input-gate projection: one big MXU-friendly GEMM, time-major f32 output.
    gates_in = (jnp.einsum("btd,dg->tbg", x.astype(mm_dtype), wi_t,
                           preferred_element_type=jnp.float32)
                + bi)                               # (T, Bp, 3H)

    # Time-invariant peephole projection (ctx @ Wp^T + bp).  Note b_hid is NOT folded in,
    # because its 'n' chunk is multiplied by the reset gate inside the recurrence.
    peep = (jnp.dot(ctx.astype(mm_dtype), wp_t,
                    preferred_element_type=jnp.float32) + bp)   # (Bp, 3H)

    # --- VMEM budget estimate (double-buffered streamed blocks + resident operands) ---
    f32 = 4
    est = (2 * tc * Bp * 3 * H * f32                              # gates_in block (x2 buf)
           + 2 * Bp * tc * H * jnp.dtype(out_dtype).itemsize      # out block (x2 buf)
           + Bp * 3 * H * f32                                     # peep
           + Bp * H * jnp.dtype(h0.dtype).itemsize                # h0
           + H * 3 * H * jnp.dtype(mm_dtype).itemsize             # Wh^T
           + 3 * H * f32                                          # bh
           + Bp * H * jnp.dtype(out_dtype).itemsize               # hlast
           + Bp * H * f32)                                        # h scratch
    vmem_limit = int(min(max(2 * est, 32 * 1024 * 1024), 64 * 1024 * 1024))

    kernel = functools.partial(_cond_gru_kernel, tc=tc, hidden_dim=H)

    out, h_last = pl.pallas_call(
        kernel,
        out_shape=(jax.ShapeDtypeStruct((Bp, T, H), out_dtype),
                   jax.ShapeDtypeStruct((Bp, H), out_dtype)),
        grid_spec=pltpu.PrefetchScalarGridSpec(
            num_scalar_prefetch=0,
            grid=(num_chunks,),
            in_specs=[
                pl.BlockSpec((tc, Bp, 3 * H), lambda c: (c, 0, 0)),  # precomputed x-gates
                pl.BlockSpec((Bp, 3 * H), lambda c: (0, 0)),         # peep (resident)
                pl.BlockSpec((Bp, H), lambda c: (0, 0)),             # h0
                pl.BlockSpec((H, 3 * H), lambda c: (0, 0)),          # Wh^T (resident)
                pl.BlockSpec((1, 3 * H), lambda c: (0, 0)),          # bh
            ],
            out_specs=[
                pl.BlockSpec((Bp, tc, H), lambda c: (0, c, 0)),      # output, batch-major
                pl.BlockSpec((Bp, H), lambda c: (0, 0)),             # final hidden
            ],
            scratch_shapes=[
                pltpu.VMEM((Bp, H), jnp.float32),                    # carried hidden state
            ],
        ),
        compiler_params=pltpu.CompilerParams(
            dimension_semantics=("arbitrary",),   # sequential recurrence over time chunks
            vmem_limit_bytes=vmem_limit),
        # TODO(synk): on v7x, add a leading "parallel" batch-chunk grid axis so the second
        # TensorCore runs an independent batch shard of the recurrence.
    )(gates_in, peep, h0, wh_t, bh)

    if Bp != B:
        out = out[:B]
        h_last = h_last[:B]
    return out, h_last


def init_params(key, input_dim, hidden_dim, dtype=jnp.float32):
    """Deterministic init matching reset_parameters(): uniform(-stdv, stdv)."""
    stdv = 1.0 / math.sqrt(hidden_dim)
    ks = jax.random.split(key, 6)
    u = lambda k, shape: jax.random.uniform(k, shape, dtype, -stdv, stdv)
    return {
        "w_in":   u(ks[0], (3 * hidden_dim, input_dim)),
        "b_in":   u(ks[1], (3 * hidden_dim,)),
        "w_hid":  u(ks[2], (3 * hidden_dim, hidden_dim)),
        "b_hid":  u(ks[3], (3 * hidden_dim,)),
        "w_peep": u(ks[4], (3 * hidden_dim, hidden_dim)),
        "b_peep": u(ks[5], (3 * hidden_dim,)),
    }


def conditional_gru_ref(x, h0, ctx, params):
    """Pure-JAX reference mirroring the PyTorch forward."""
    H = h0.shape[-1]
    peep = ctx @ params["w_peep"].T + params["b_peep"]
    p_r, p_i, p_n = peep[:, :H], peep[:, H:2 * H], peep[:, 2 * H:]

    def step(h, x_t):
        ig = x_t @ params["w_in"].T + params["b_in"]
        hg = h @ params["w_hid"].T + params["b_hid"]
        i_r, i_i, i_n = ig[:, :H], ig[:, H:2 * H], ig[:, 2 * H:]
        h_r, h_i, h_n = hg[:, :H], hg[:, H:2 * H], hg[:, 2 * H:]
        r = jax.nn.sigmoid(i_r + h_r + p_r)
        z = jax.nn.sigmoid(i_i + h_i + p_i)
        n = jnp.tanh(i_n + r * h_n + p_n)
        hy = n + z * (h - n)
        return hy, hy

    h_last, out_tm = jax.lax.scan(step, h0, jnp.transpose(x, (1, 0, 2)))
    return jnp.transpose(out_tm, (1, 0, 2)), h_last


if __name__ == "__main__":
    B, T, D, H = 2, 16, 16, 32
    key = jax.random.PRNGKey(0)
    kp, kx, kh, kc = jax.random.split(key, 4)

    params = init_params(kp, D, H)
    x = jax.random.normal(kx, (B, T, D), jnp.float32)
    h0 = jax.random.normal(kh, (B, H), jnp.float32)
    ctx = jax.random.normal(kc, (B, H), jnp.float32)

    # f32 path (tight check against the pure-JAX reference); time_chunk=8 -> 2 grid chunks.
    out, h_last = conditional_gru(x, h0, ctx, params, time_chunk=8)
    jax.block_until_ready((out, h_last))

    out_ref, h_ref = conditional_gru_ref(x, h0, ctx, params)
    assert out.shape == (B, T, H) and h_last.shape == (B, H)
    assert jnp.allclose(out, out_ref, atol=1e-5, rtol=1e-5)
    assert jnp.allclose(h_last, h_ref, atol=1e-5, rtol=1e-5)

    # bf16-weight fast path (f32 accumulation + f32 state kept); loose tolerance.
    out_bf, h_bf = conditional_gru(x, h0, ctx, params, time_chunk=8,
                                   matmul_dtype=jnp.bfloat16)
    jax.block_until_ready((out_bf, h_bf))
    assert jnp.allclose(out_bf, out_ref, atol=1e-1, rtol=1e-1)
    assert jnp.allclose(h_bf, h_ref, atol=1e-1, rtol=1e-1)

    print("KERNEL_OK")
</pallas_src>

<mosaic_0001>
module attributes {stable_mosaic.version = 11 : i64} {
  func.func @_cond_gru_kernel(%arg0: i32, %arg1: memref<8x8x96xf32, #tpu.memory_space<vmem>>, %arg2: memref<8x96xf32, #tpu.memory_space<vmem>>, %arg3: memref<8x32xf32, #tpu.memory_space<vmem>>, %arg4: memref<32x96xf32, #tpu.memory_space<vmem>>, %arg5: memref<1x96xf32, #tpu.memory_space<vmem>>, %arg6: memref<8x8x32xf32, #tpu.memory_space<vmem>>, %arg7: memref<8x32xf32, #tpu.memory_space<vmem>>, %arg8: memref<8x32xf32, #tpu.memory_space<vmem>>) attributes {dimension_semantics = [#tpu.dimension_semantics<arbitrary>], iteration_bounds = array<i64: 2>, scalar_prefetch = 0 : i64, scratch_operands = 1 : i64, tpu.core_type = #tpu.core_type<tc>, window_params = [{transform_indices = @transform_0, window_bounds = array<i64: 8, 8, 96>}, {pipeline_mode = #tpu.pipeline_mode<synchronous>, transform_indices = @transform_1, window_bounds = array<i64: 8, 96>}, {pipeline_mode = #tpu.pipeline_mode<synchronous>, transform_indices = @transform_2, window_bounds = array<i64: 8, 32>}, {pipeline_mode = #tpu.pipeline_mode<synchronous>, transform_indices = @transform_3, window_bounds = array<i64: 32, 96>}, {pipeline_mode = #tpu.pipeline_mode<synchronous>, transform_indices = @transform_4, window_bounds = array<i64: 1, 96>}, {transform_indices = @transform_5, window_bounds = array<i64: 8, 8, 32>}, {pipeline_mode = #tpu.pipeline_mode<synchronous>, transform_indices = @transform_6, window_bounds = array<i64: 8, 32>}]} {
    %c0_i32 = arith.constant 0 : i32
    %0 = arith.cmpi eq, %arg0, %c0_i32 : i32
    %1 = arith.extui %0 : i1 to i32
    %c0_i32_0 = arith.constant 0 : i32
    %2 = arith.cmpi ne, %1, %c0_i32_0 : i32
    scf.if %2 {
      %c0_75 = arith.constant 0 : index
      %c0_76 = arith.constant 0 : index
      %294 = vector.load %arg3[%c0_75, %c0_76] : memref<8x32xf32, #tpu.memory_space<vmem>>, vector<8x32xf32>
      %c0_77 = arith.constant 0 : index
      %c0_78 = arith.constant 0 : index
      %295 = vector.load %arg8[%c0_77, %c0_78] : memref<8x32xf32, #tpu.memory_space<vmem>>, vector<8x32xf32>
      tpu.vector_store %arg8[%c0_77, %c0_78], %294 {strides = array<i32>} : memref<8x32xf32, #tpu.memory_space<vmem>>, vector<8x32xf32>,
    } else {
    }
    %c0 = arith.constant 0 : index
    %c0_1 = arith.constant 0 : index
    %3 = vector.load %arg2[%c0, %c0_1] : memref<8x96xf32, #tpu.memory_space<vmem>>, vector<8x96xf32>
    %4 = vector.extract_strided_slice %3 {offsets = [0, 0], sizes = [8, 32], strides = [1, 1]} : vector<8x96xf32> to vector<8x32xf32>
    %5 = vector.extract_strided_slice %3 {offsets = [0, 32], sizes = [8, 32], strides = [1, 1]} : vector<8x96xf32> to vector<8x32xf32>
    %6 = vector.extract_strided_slice %3 {offsets = [0, 64], sizes = [8, 32], strides = [1, 1]} : vector<8x96xf32> to vector<8x32xf32>
    %c0_2 = arith.constant 0 : index
    %c0_3 = arith.constant 0 : index
    %7 = vector.load %arg4[%c0_2, %c0_3] : memref<32x96xf32, #tpu.memory_space<vmem>>, vector<32x96xf32>
    %c0_4 = arith.constant 0 : index
    %c0_5 = arith.constant 0 : index
    %8 = vector.load %arg5[%c0_4, %c0_5] : memref<1x96xf32, #tpu.memory_space<vmem>>, vector<1x96xf32>
    %c0_6 = arith.constant 0 : index
    %c0_7 = arith.constant 0 : index
    %9 = vector.load %arg8[%c0_6, %c0_7] : memref<8x32xf32, #tpu.memory_space<vmem>>, vector<8x32xf32>
    %c0_8 = arith.constant 0 : index
    %c0_9 = arith.constant 0 : index
    %c0_10 = arith.constant 0 : index
    %10 = vector.load %arg1[%c0_8, %c0_9, %c0_10] : memref<8x8x96xf32, #tpu.memory_space<vmem>>, vector<1x8x96xf32>
    %11 = vector.shape_cast %10 : vector<1x8x96xf32> to vector<8x96xf32>
    %cst = arith.constant dense<0.000000e+00> : vector<8x96xf32>
    %12 = tpu.matmul %9, %7, %cst {dimension_numbers = #tpu.dot_dimension_numbers<[1], [0], [0], [1], [0, 0, 1, 1], [], []>} : vector<8x32xf32>, vector<32x96xf32>, vector<8x96xf32> -> vector<8x96xf32>
    %13 = vector.broadcast %8 : vector<1x96xf32> to vector<8x96xf32>
    %14 = arith.addf %12, %13 : vector<8x96xf32>
    %15 = vector.extract_strided_slice %11 {offsets = [0, 0], sizes = [8, 32], strides = [1, 1]} : vector<8x96xf32> to vector<8x32xf32>
    %16 = vector.extract_strided_slice %11 {offsets = [0, 32], sizes = [8, 32], strides = [1, 1]} : vector<8x96xf32> to vector<8x32xf32>
    %17 = vector.extract_strided_slice %11 {offsets = [0, 64], sizes = [8, 32], strides = [1, 1]} : vector<8x96xf32> to vector<8x32xf32>
    %18 = vector.extract_strided_slice %14 {offsets = [0, 0], sizes = [8, 32], strides = [1, 1]} : vector<8x96xf32> to vector<8x32xf32>
    %19 = vector.extract_strided_slice %14 {offsets = [0, 32], sizes = [8, 32], strides = [1, 1]} : vector<8x96xf32> to vector<8x32xf32>
    %20 = vector.extract_strided_slice %14 {offsets = [0, 64], sizes = [8, 32], strides = [1, 1]} : vector<8x96xf32> to vector<8x32xf32>
    %21 = arith.addf %15, %18 : vector<8x32xf32>
    %22 = arith.addf %21, %4 : vector<8x32xf32>
    %23 = arith.negf %22 : vector<8x32xf32>
    %24 = math.exp %23 : vector<8x32xf32>
    %cst_11 = arith.constant 1.000000e+00 : f32
    %25 = vector.broadcast %cst_11 : f32 to vector<8x32xf32>
    %26 = arith.addf %25, %24 : vector<8x32xf32>
    %27 = arith.divf %25, %26 : vector<8x32xf32>
    %28 = arith.addf %16, %19 : vector<8x32xf32>
    %29 = arith.addf %28, %5 : vector<8x32xf32>
    %30 = arith.negf %29 : vector<8x32xf32>
    %31 = math.exp %30 : vector<8x32xf32>
    %cst_12 = arith.constant 1.000000e+00 : f32
    %32 = vector.broadcast %cst_12 : f32 to vector<8x32xf32>
    %33 = arith.addf %32, %31 : vector<8x32xf32>
    %34 = arith.divf %32, %33 : vector<8x32xf32>
    %35 = arith.mulf %27, %20 : vector<8x32xf32>
    %36 = arith.addf %17, %35 : vector<8x32xf32>
    %37 = arith.addf %36, %6 : vector<8x32xf32>
    %38 = math.tanh %37 : vector<8x32xf32>
    %39 = arith.subf %9, %38 : vector<8x32xf32>
    %40 = arith.mulf %34, %39 : vector<8x32xf32>
    %41 = arith.addf %38, %40 : vector<8x32xf32>
    %c0_13 = arith.constant 0 : index
    %c0_14 = arith.constant 0 : index
    %c0_15 = arith.constant 0 : index
    %42 = vector.load %arg6[%c0_13, %c0_14, %c0_15] : memref<8x8x32xf32, #tpu.memory_space<vmem>>, vector<8x1x32xf32>
    %43 = vector.shape_cast %42 : vector<8x1x32xf32> to vector<8x32xf32>
    %44 = vector.shape_cast %41 : vector<8x32xf32> to vector<8x1x32xf32>
    tpu.vector_store %arg6[%c0_13, %c0_14, %c0_15], %44 {strides = array<i32>} : memref<8x8x32xf32, #tpu.memory_space<vmem>>, vector<8x1x32xf32>,
    %c1 = arith.constant 1 : index
    %c0_16 = arith.constant 0 : index
    %c0_17 = arith.constant 0 : index
    %45 = vector.load %arg1[%c1, %c0_16, %c0_17] : memref<8x8x96xf32, #tpu.memory_space<vmem>>, vector<1x8x96xf32>
    %46 = vector.shape_cast %45 : vector<1x8x96xf32> to vector<8x96xf32>
    %cst_18 = arith.constant dense<0.000000e+00> : vector<8x96xf32>
    %47 = tpu.matmul %41, %7, %cst_18 {dimension_numbers = #tpu.dot_dimension_numbers<[1], [0], [0], [1], [0, 0, 1, 1], [], []>} : vector<8x32xf32>, vector<32x96xf32>, vector<8x96xf32> -> vector<8x96xf32>
    %48 = vector.broadcast %8 : vector<1x96xf32> to vector<8x96xf32>
    %49 = arith.addf %47, %48 : vector<8x96xf32>
    %50 = vector.extract_strided_slice %46 {offsets = [0, 0], sizes = [8, 32], strides = [1, 1]} : vector<8x96xf32> to vector<8x32xf32>
    %51 = vector.extract_strided_slice %46 {offsets = [0, 32], sizes = [8, 32], strides = [1, 1]} : vector<8x96xf32> to vector<8x32xf32>
    %52 = vector.extract_strided_slice %46 {offsets = [0, 64], sizes = [8, 32], strides = [1, 1]} : vector<8x96xf32> to vector<8x32xf32>
    %53 = vector.extract_strided_slice %49 {offsets = [0, 0], sizes = [8, 32], strides = [1, 1]} : vector<8x96xf32> to vector<8x32xf32>
    %54 = vector.extract_strided_slice %49 {offsets = [0, 32], sizes = [8, 32], strides = [1, 1]} : vector<8x96xf32> to vector<8x32xf32>
    %55 = vector.extract_strided_slice %49 {offsets = [0, 64], sizes = [8, 32], strides = [1, 1]} : vector<8x96xf32> to vector<8x32xf32>
    %56 = arith.addf %50, %53 : vector<8x32xf32>
    %57 = arith.addf %56, %4 : vector<8x32xf32>
    %58 = arith.negf %57 : vector<8x32xf32>
    %59 = math.exp %58 : vector<8x32xf32>
    %cst_19 = arith.constant 1.000000e+00 : f32
    %60 = vector.broadcast %cst_19 : f32 to vector<8x32xf32>
    %61 = arith.addf %60, %59 : vector<8x32xf32>
    %62 = arith.divf %60, %61 : vector<8x32xf32>
    %63 = arith.addf %51, %54 : vector<8x32xf32>
    %64 = arith.addf %63, %5 : vector<8x32xf32>
    %65 = arith.negf %64 : vector<8x32xf32>
    %66 = math.exp %65 : vector<8x32xf32>
    %cst_20 = arith.constant 1.000000e+00 : f32
    %67 = vector.broadcast %cst_20 : f32 to vector<8x32xf32>
    %68 = arith.addf %67, %66 : vector<8x32xf32>
    %69 = arith.divf %67, %68 : vector<8x32xf32>
    %70 = arith.mulf %62, %55 : vector<8x32xf32>
    %71 = arith.addf %52, %70 : vector<8x32xf32>
    %72 = arith.addf %71, %6 : vector<8x32xf32>
    %73 = math.tanh %72 : vector<8x32xf32>
    %74 = arith.subf %41, %73 : vector<8x32xf32>
    %75 = arith.mulf %69, %74 : vector<8x32xf32>
    %76 = arith.addf %73, %75 : vector<8x32xf32>
    %c0_21 = arith.constant 0 : index
    %c1_22 = arith.constant 1 : index
    %c0_23 = arith.constant 0 : index
    %77 = vector.load %arg6[%c0_21, %c1_22, %c0_23] : memref<8x8x32xf32, #tpu.memory_space<vmem>>, vector<8x1x32xf32>
    %78 = vector.shape_cast %77 : vector<8x1x32xf32> to vector<8x32xf32>
    %79 = vector.shape_cast %76 : vector<8x32xf32> to vector<8x1x32xf32>
    tpu.vector_store %arg6[%c0_21, %c1_22, %c0_23], %79 {strides = array<i32>} : memref<8x8x32xf32, #tpu.memory_space<vmem>>, vector<8x1x32xf32>,
    %c2 = arith.constant 2 : index
    %c0_24 = arith.constant 0 : index
    %c0_25 = arith.constant 0 : index
    %80 = vector.load %arg1[%c2, %c0_24, %c0_25] : memref<8x8x96xf32, #tpu.memory_space<vmem>>, vector<1x8x96xf32>
    %81 = vector.shape_cast %80 : vector<1x8x96xf32> to vector<8x96xf32>
    %cst_26 = arith.constant dense<0.000000e+00> : vector<8x96xf32>
    %82 = tpu.matmul %76, %7, %cst_26 {dimension_numbers = #tpu.dot_dimension_numbers<[1], [0], [0], [1], [0, 0, 1, 1], [], []>} : vector<8x32xf32>, vector<32x96xf32>, vector<8x96xf32> -> vector<8x96xf32>
    %83 = vector.broadcast %8 : vector<1x96xf32> to vector<8x96xf32>
    %84 = arith.addf %82, %83 : vector<8x96xf32>
    %85 = vector.extract_strided_slice %81 {offsets = [0, 0], sizes = [8, 32], strides = [1, 1]} : vector<8x96xf32> to vector<8x32xf32>
    %86 = vector.extract_strided_slice %81 {offsets = [0, 32], sizes = [8, 32], strides = [1, 1]} : vector<8x96xf32> to vector<8x32xf32>
    %87 = vector.extract_strided_slice %81 {offsets = [0, 64], sizes = [8, 32], strides = [1, 1]} : vector<8x96xf32> to vector<8x32xf32>
    %88 = vector.extract_strided_slice %84 {offsets = [0, 0], sizes = [8, 32], strides = [1, 1]} : vector<8x96xf32> to vector<8x32xf32>
    %89 = vector.extract_strided_slice %84 {offsets = [0, 32], sizes = [8, 32], strides = [1, 1]} : vector<8x96xf32> to vector<8x32xf32>
    %90 = vector.extract_strided_slice %84 {offsets = [0, 64], sizes = [8, 32], strides = [1, 1]} : vector<8x96xf32> to vector<8x32xf32>
    %91 = arith.addf %85, %88 : vector<8x32xf32>
    %92 = arith.addf %91, %4 : vector<8x32xf32>
    %93 = arith.negf %92 : vector<8x32xf32>
    %94 = math.exp %93 : vector<8x32xf32>
    %cst_27 = arith.constant 1.000000e+00 : f32
    %95 = vector.broadcast %cst_27 : f32 to vector<8x32xf32>
    %96 = arith.addf %95, %94 : vector<8x32xf32>
    %97 = arith.divf %95, %96 : vector<8x32xf32>
    %98 = arith.addf %86, %89 : vector<8x32xf32>
    %99 = arith.addf %98, %5 : vector<8x32xf32>
    %100 = arith.negf %99 : vector<8x32xf32>
    %101 = math.exp %100 : vector<8x32xf32>
    %cst_28 = arith.constant 1.000000e+00 : f32
    %102 = vector.broadcast %cst_28 : f32 to vector<8x32xf32>
    %103 = arith.addf %102, %101 : vector<8x32xf32>
    %104 = arith.divf %102, %103 : vector<8x32xf32>
    %105 = arith.mulf %97, %90 : vector<8x32xf32>
    %106 = arith.addf %87, %105 : vector<8x32xf32>
    %107 = arith.addf %106, %6 : vector<8x32xf32>
    %108 = math.tanh %107 : vector<8x32xf32>
    %109 = arith.subf %76, %108 : vector<8x32xf32>
    %110 = arith.mulf %104, %109 : vector<8x32xf32>
    %111 = arith.addf %108, %110 : vector<8x32xf32>
    %c0_29 = arith.constant 0 : index
    %c2_30 = arith.constant 2 : index
    %c0_31 = arith.constant 0 : index
    %112 = vector.load %arg6[%c0_29, %c2_30, %c0_31] : memref<8x8x32xf32, #tpu.memory_space<vmem>>, vector<8x1x32xf32>
    %113 = vector.shape_cast %112 : vector<8x1x32xf32> to vector<8x32xf32>
    %114 = vector.shape_cast %111 : vector<8x32xf32> to vector<8x1x32xf32>
    tpu.vector_store %arg6[%c0_29, %c2_30, %c0_31], %114 {strides = array<i32>} : memref<8x8x32xf32, #tpu.memory_space<vmem>>, vector<8x1x32xf32>,
    %c3 = arith.constant 3 : index
    %c0_32 = arith.constant 0 : index
    %c0_33 = arith.constant 0 : index
    %115 = vector.load %arg1[%c3, %c0_32, %c0_33] : memref<8x8x96xf32, #tpu.memory_space<vmem>>, vector<1x8x96xf32>
    %116 = vector.shape_cast %115 : vector<1x8x96xf32> to vector<8x96xf32>
    %cst_34 = arith.constant dense<0.000000e+00> : vector<8x96xf32>
    %117 = tpu.matmul %111, %7, %cst_34 {dimension_numbers = #tpu.dot_dimension_numbers<[1], [0], [0], [1], [0, 0, 1, 1], [], []>} : vector<8x32xf32>, vector<32x96xf32>, vector<8x96xf32> -> vector<8x96xf32>
    %118 = vector.broadcast %8 : vector<1x96xf32> to vector<8x96xf32>
    %119 = arith.addf %117, %118 : vector<8x96xf32>
    %120 = vector.extract_strided_slice %116 {offsets = [0, 0], sizes = [8, 32], strides = [1, 1]} : vector<8x96xf32> to vector<8x32xf32>
    %121 = vector.extract_strided_slice %116 {offsets = [0, 32], sizes = [8, 32], strides = [1, 1]} : vector<8x96xf32> to vector<8x32xf32>
    %122 = vector.extract_strided_slice %116 {offsets = [0, 64], sizes = [8, 32], strides = [1, 1]} : vector<8x96xf32> to vector<8x32xf32>
    %123 = vector.extract_strided_slice %119 {offsets = [0, 0], sizes = [8, 32], strides = [1, 1]} : vector<8x96xf32> to vector<8x32xf32>
    %124 = vector.extract_strided_slice %119 {offsets = [0, 32], sizes = [8, 32], strides = [1, 1]} : vector<8x96xf32> to vector<8x32xf32>
    %125 = vector.extract_strided_slice %119 {offsets = [0, 64], sizes = [8, 32], strides = [1, 1]} : vector<8x96xf32> to vector<8x32xf32>
    %126 = arith.addf %120, %123 : vector<8x32xf32>
    %127 = arith.addf %126, %4 : vector<8x32xf32>
    %128 = arith.negf %127 : vector<8x32xf32>
    %129 = math.exp %128 : vector<8x32xf32>
    %cst_35 = arith.constant 1.000000e+00 : f32
    %130 = vector.broadcast %cst_35 : f32 to vector<8x32xf32>
    %131 = arith.addf %130, %129 : vector<8x32xf32>
    %132 = arith.divf %130, %131 : vector<8x32xf32>
    %133 = arith.addf %121, %124 : vector<8x32xf32>
    %134 = arith.addf %133, %5 : vector<8x32xf32>
    %135 = arith.negf %134 : vector<8x32xf32>
    %136 = math.exp %135 : vector<8x32xf32>
    %cst_36 = arith.constant 1.000000e+00 : f32
    %137 = vector.broadcast %cst_36 : f32 to vector<8x32xf32>
    %138 = arith.addf %137, %136 : vector<8x32xf32>
    %139 = arith.divf %137, %138 : vector<8x32xf32>
    %140 = arith.mulf %132, %125 : vector<8x32xf32>
    %141 = arith.addf %122, %140 : vector<8x32xf32>
    %142 = arith.addf %141, %6 : vector<8x32xf32>
    %143 = math.tanh %142 : vector<8x32xf32>
    %144 = arith.subf %111, %143 : vector<8x32xf32>
    %145 = arith.mulf %139, %144 : vector<8x32xf32>
    %146 = arith.addf %143, %145 : vector<8x32xf32>
    %c0_37 = arith.constant 0 : index
    %c3_38 = arith.constant 3 : index
    %c0_39 = arith.constant 0 : index
    %147 = vector.load %arg6[%c0_37, %c3_38, %c0_39] : memref<8x8x32xf32, #tpu.memory_space<vmem>>, vector<8x1x32xf32>
    %148 = vector.shape_cast %147 : vector<8x1x32xf32> to vector<8x32xf32>
    %149 = vector.shape_cast %146 : vector<8x32xf32> to vector<8x1x32xf32>
    tpu.vector_store %arg6[%c0_37, %c3_38, %c0_39], %149 {strides = array<i32>} : memref<8x8x32xf32, #tpu.memory_space<vmem>>, vector<8x1x32xf32>,
    %c4 = arith.constant 4 : index
    %c0_40 = arith.constant 0 : index
    %c0_41 = arith.constant 0 : index
    %150 = vector.load %arg1[%c4, %c0_40, %c0_41] : memref<8x8x96xf32, #tpu.memory_space<vmem>>, vector<1x8x96xf32>
    %151 = vector.shape_cast %150 : vector<1x8x96xf32> to vector<8x96xf32>
    %cst_42 = arith.constant dense<0.000000e+00> : vector<8x96xf32>
    %152 = tpu.matmul %146, %7, %cst_42 {dimension_numbers = #tpu.dot_dimension_numbers<[1], [0], [0], [1], [0, 0, 1, 1], [], []>} : vector<8x32xf32>, vector<32x96xf32>, vector<8x96xf32> -> vector<8x96xf32>
    %153 = vector.broadcast %8 : vector<1x96xf32> to vector<8x96xf32>
    %154 = arith.addf %152, %153 : vector<8x96xf32>
    %155 = vector.extract_strided_slice %151 {offsets = [0, 0], sizes = [8, 32], strides = [1, 1]} : vector<8x96xf32> to vector<8x32xf32>
    %156 = vector.extract_strided_slice %151 {offsets = [0, 32], sizes = [8, 32], strides = [1, 1]} : vector<8x96xf32> to vector<8x32xf32>
    %157 = vector.extract_strided_slice %151 {offsets = [0, 64], sizes = [8, 32], strides = [1, 1]} : vector<8x96xf32> to vector<8x32xf32>
    %158 = vector.extract_strided_slice %154 {offsets = [0, 0], sizes = [8, 32], strides = [1, 1]} : vector<8x96xf32> to vector<8x32xf32>
    %159 = vector.extract_strided_slice %154 {offsets = [0, 32], sizes = [8, 32], strides = [1, 1]} : vector<8x96xf32> to vector<8x32xf32>
    %160 = vector.extract_strided_slice %154 {offsets = [0, 64], sizes = [8, 32], strides = [1, 1]} : vector<8x96xf32> to vector<8x32xf32>
    %161 = arith.addf %155, %158 : vector<8x32xf32>
    %162 = arith.addf %161, %4 : vector<8x32xf32>
    %163 = arith.negf %162 : vector<8x32xf32>
    %164 = math.exp %163 : vector<8x32xf32>
    %cst_43 = arith.constant 1.000000e+00 : f32
    %165 = vector.broadcast %cst_43 : f32 to vector<8x32xf32>
    %166 = arith.addf %165, %164 : vector<8x32xf32>
    %167 = arith.divf %165, %166 : vector<8x32xf32>
    %168 = arith.addf %156, %159 : vector<8x32xf32>
    %169 = arith.addf %168, %5 : vector<8x32xf32>
    %170 = arith.negf %169 : vector<8x32xf32>
    %171 = math.exp %170 : vector<8x32xf32>
    %cst_44 = arith.constant 1.000000e+00 : f32
    %172 = vector.broadcast %cst_44 : f32 to vector<8x32xf32>
    %173 = arith.addf %172, %171 : vector<8x32xf32>
    %174 = arith.divf %172, %173 : vector<8x32xf32>
    %175 = arith.mulf %167, %160 : vector<8x32xf32>
    %176 = arith.addf %157, %175 : vector<8x32xf32>
    %177 = arith.addf %176, %6 : vector<8x32xf32>
    %178 = math.tanh %177 : vector<8x32xf32>
    %179 = arith.subf %146, %178 : vector<8x32xf32>
    %180 = arith.mulf %174, %179 : vector<8x32xf32>
    %181 = arith.addf %178, %180 : vector<8x32xf32>
    %c0_45 = arith.constant 0 : index
    %c4_46 = arith.constant 4 : index
    %c0_47 = arith.constant 0 : index
    %182 = vector.load %arg6[%c0_45, %c4_46, %c0_47] : memref<8x8x32xf32, #tpu.memory_space<vmem>>, vector<8x1x32xf32>
    %183 = vector.shape_cast %182 : vector<8x1x32xf32> to vector<8x32xf32>
    %184 = vector.shape_cast %181 : vector<8x32xf32> to vector<8x1x32xf32>
    tpu.vector_store %arg6[%c0_45, %c4_46, %c0_47], %184 {strides = array<i32>} : memref<8x8x32xf32, #tpu.memory_space<vmem>>, vector<8x1x32xf32>,
    %c5 = arith.constant 5 : index
    %c0_48 = arith.constant 0 : index
    %c0_49 = arith.constant 0 : index
    %185 = vector.load %arg1[%c5, %c0_48, %c0_49] : memref<8x8x96xf32, #tpu.memory_space<vmem>>, vector<1x8x96xf32>
    %186 = vector.shape_cast %185 : vector<1x8x96xf32> to vector<8x96xf32>
    %cst_50 = arith.constant dense<0.000000e+00> : vector<8x96xf32>
    %187 = tpu.matmul %181, %7, %cst_50 {dimension_numbers = #tpu.dot_dimension_numbers<[1], [0], [0], [1], [0, 0, 1, 1], [], []>} : vector<8x32xf32>, vector<32x96xf32>, vector<8x96xf32> -> vector<8x96xf32>
    %188 = vector.broadcast %8 : vector<1x96xf32> to vector<8x96xf32>
    %189 = arith.addf %187, %188 : vector<8x96xf32>
    %190 = vector.extract_strided_slice %186 {offsets = [0, 0], sizes = [8, 32], strides = [1, 1]} : vector<8x96xf32> to vector<8x32xf32>
    %191 = vector.extract_strided_slice %186 {offsets = [0, 32], sizes = [8, 32], strides = [1, 1]} : vector<8x96xf32> to vector<8x32xf32>
    %192 = vector.extract_strided_slice %186 {offsets = [0, 64], sizes = [8, 32], strides = [1, 1]} : vector<8x96xf32> to vector<8x32xf32>
    %193 = vector.extract_strided_slice %189 {offsets = [0, 0], sizes = [8, 32], strides = [1, 1]} : vector<8x96xf32> to vector<8x32xf32>
    %194 = vector.extract_strided_slice %189 {offsets = [0, 32], sizes = [8, 32], strides = [1, 1]} : vector<8x96xf32> to vector<8x32xf32>
    %195 = vector.extract_strided_slice %189 {offsets = [0, 64], sizes = [8, 32], strides = [1, 1]} : vector<8x96xf32> to vector<8x32xf32>
    %196 = arith.addf %190, %193 : vector<8x32xf32>
    %197 = arith.addf %196, %4 : vector<8x32xf32>
    %198 = arith.negf %197 : vector<8x32xf32>
    %199 = math.exp %198 : vector<8x32xf32>
    %cst_51 = arith.constant 1.000000e+00 : f32
    %200 = vector.broadcast %cst_51 : f32 to vector<8x32xf32>
    %201 = arith.addf %200, %199 : vector<8x32xf32>
    %202 = arith.divf %200, %201 : vector<8x32xf32>
    %203 = arith.addf %191, %194 : vector<8x32xf32>
    %204 = arith.addf %203, %5 : vector<8x32xf32>
    %205 = arith.negf %204 : vector<8x32xf32>
    %206 = math.exp %205 : vector<8x32xf32>
    %cst_52 = arith.constant 1.000000e+00 : f32
    %207 = vector.broadcast %cst_52 : f32 to vector<8x32xf32>
    %208 = arith.addf %207, %206 : vector<8x32xf32>
    %209 = arith.divf %207, %208 : vector<8x32xf32>
    %210 = arith.mulf %202, %195 : vector<8x32xf32>
    %211 = arith.addf %192, %210 : vector<8x32xf32>
    %212 = arith.addf %211, %6 : vector<8x32xf32>
    %213 = math.tanh %212 : vector<8x32xf32>
    %214 = arith.subf %181, %213 : vector<8x32xf32>
    %215 = arith.mulf %209, %214 : vector<8x32xf32>
    %216 = arith.addf %213, %215 : vector<8x32xf32>
    %c0_53 = arith.constant 0 : index
    %c5_54 = arith.constant 5 : index
    %c0_55 = arith.constant 0 : index
    %217 = vector.load %arg6[%c0_53, %c5_54, %c0_55] : memref<8x8x32xf32, #tpu.memory_space<vmem>>, vector<8x1x32xf32>
    %218 = vector.shape_cast %217 : vector<8x1x32xf32> to vector<8x32xf32>
    %219 = vector.shape_cast %216 : vector<8x32xf32> to vector<8x1x32xf32>
    tpu.vector_store %arg6[%c0_53, %c5_54, %c0_55], %219 {strides = array<i32>} : memref<8x8x32xf32, #tpu.memory_space<vmem>>, vector<8x1x32xf32>,
    %c6 = arith.constant 6 : index
    %c0_56 = arith.constant 0 : index
    %c0_57 = arith.constant 0 : index
    %220 = vector.load %arg1[%c6, %c0_56, %c0_57] : memref<8x8x96xf32, #tpu.memory_space<vmem>>, vector<1x8x96xf32>
    %221 = vector.shape_cast %220 : vector<1x8x96xf32> to vector<8x96xf32>
    %cst_58 = arith.constant dense<0.000000e+00> : vector<8x96xf32>
    %222 = tpu.matmul %216, %7, %cst_58 {dimension_numbers = #tpu.dot_dimension_numbers<[1], [0], [0], [1], [0, 0, 1, 1], [], []>} : vector<8x32xf32>, vector<32x96xf32>, vector<8x96xf32> -> vector<8x96xf32>
    %223 = vector.broadcast %8 : vector<1x96xf32> to vector<8x96xf32>
    %224 = arith.addf %222, %223 : vector<8x96xf32>
    %225 = vector.extract_strided_slice %221 {offsets = [0, 0], sizes = [8, 32], strides = [1, 1]} : vector<8x96xf32> to vector<8x32xf32>
    %226 = vector.extract_strided_slice %221 {offsets = [0, 32], sizes = [8, 32], strides = [1, 1]} : vector<8x96xf32> to vector<8x32xf32>
    %227 = vector.extract_strided_slice %221 {offsets = [0, 64], sizes = [8, 32], strides = [1, 1]} : vector<8x96xf32> to vector<8x32xf32>
    %228 = vector.extract_strided_slice %224 {offsets = [0, 0], sizes = [8, 32], strides = [1, 1]} : vector<8x96xf32> to vector<8x32xf32>
    %229 = vector.extract_strided_slice %224 {offsets = [0, 32], sizes = [8, 32], strides = [1, 1]} : vector<8x96xf32> to vector<8x32xf32>
    %230 = vector.extract_strided_slice %224 {offsets = [0, 64], sizes = [8, 32], strides = [1, 1]} : vector<8x96xf32> to vector<8x32xf32>
    %231 = arith.addf %225, %228 : vector<8x32xf32>
    %232 = arith.addf %231, %4 : vector<8x32xf32>
    %233 = arith.negf %232 : vector<8x32xf32>
    %234 = math.exp %233 : vector<8x32xf32>
    %cst_59 = arith.constant 1.000000e+00 : f32
    %235 = vector.broadcast %cst_59 : f32 to vector<8x32xf32>
    %236 = arith.addf %235, %234 : vector<8x32xf32>
    %237 = arith.divf %235, %236 : vector<8x32xf32>
    %238 = arith.addf %226, %229 : vector<8x32xf32>
    %239 = arith.addf %238, %5 : vector<8x32xf32>
    %240 = arith.negf %239 : vector<8x32xf32>
    %241 = math.exp %240 : vector<8x32xf32>
    %cst_60 = arith.constant 1.000000e+00 : f32
    %242 = vector.broadcast %cst_60 : f32 to vector<8x32xf32>
    %243 = arith.addf %242, %241 : vector<8x32xf32>
    %244 = arith.divf %242, %243 : vector<8x32xf32>
    %245 = arith.mulf %237, %230 : vector<8x32xf32>
    %246 = arith.addf %227, %245 : vector<8x32xf32>
    %247 = arith.addf %246, %6 : vector<8x32xf32>
    %248 = math.tanh %247 : vector<8x32xf32>
    %249 = arith.subf %216, %248 : vector<8x32xf32>
    %250 = arith.mulf %244, %249 : vector<8x32xf32>
    %251 = arith.addf %248, %250 : vector<8x32xf32>
    %c0_61 = arith.constant 0 : index
    %c6_62 = arith.constant 6 : index
    %c0_63 = arith.constant 0 : index
    %252 = vector.load %arg6[%c0_61, %c6_62, %c0_63] : memref<8x8x32xf32, #tpu.memory_space<vmem>>, vector<8x1x32xf32>
    %253 = vector.shape_cast %252 : vector<8x1x32xf32> to vector<8x32xf32>
    %254 = vector.shape_cast %251 : vector<8x32xf32> to vector<8x1x32xf32>
    tpu.vector_store %arg6[%c0_61, %c6_62, %c0_63], %254 {strides = array<i32>} : memref<8x8x32xf32, #tpu.memory_space<vmem>>, vector<8x1x32xf32>,
    %c7 = arith.constant 7 : index
    %c0_64 = arith.constant 0 : index
    %c0_65 = arith.constant 0 : index
    %255 = vector.load %arg1[%c7, %c0_64, %c0_65] : memref<8x8x96xf32, #tpu.memory_space<vmem>>, vector<1x8x96xf32>
    %256 = vector.shape_cast %255 : vector<1x8x96xf32> to vector<8x96xf32>
    %cst_66 = arith.constant dense<0.000000e+00> : vector<8x96xf32>
    %257 = tpu.matmul %251, %7, %cst_66 {dimension_numbers = #tpu.dot_dimension_numbers<[1], [0], [0], [1], [0, 0, 1, 1], [], []>} : vector<8x32xf32>, vector<32x96xf32>, vector<8x96xf32> -> vector<8x96xf32>
    %258 = vector.broadcast %8 : vector<1x96xf32> to vector<8x96xf32>
    %259 = arith.addf %257, %258 : vector<8x96xf32>
    %260 = vector.extract_strided_slice %256 {offsets = [0, 0], sizes = [8, 32], strides = [1, 1]} : vector<8x96xf32> to vector<8x32xf32>
    %261 = vector.extract_strided_slice %256 {offsets = [0, 32], sizes = [8, 32], strides = [1, 1]} : vector<8x96xf32> to vector<8x32xf32>
    %262 = vector.extract_strided_slice %256 {offsets = [0, 64], sizes = [8, 32], strides = [1, 1]} : vector<8x96xf32> to vector<8x32xf32>
    %263 = vector.extract_strided_slice %259 {offsets = [0, 0], sizes = [8, 32], strides = [1, 1]} : vector<8x96xf32> to vector<8x32xf32>
    %264 = vector.extract_strided_slice %259 {offsets = [0, 32], sizes = [8, 32], strides = [1, 1]} : vector<8x96xf32> to vector<8x32xf32>
    %265 = vector.extract_strided_slice %259 {offsets = [0, 64], sizes = [8, 32], strides = [1, 1]} : vector<8x96xf32> to vector<8x32xf32>
    %266 = arith.addf %260, %263 : vector<8x32xf32>
    %267 = arith.addf %266, %4 : vector<8x32xf32>
    %268 = arith.negf %267 : vector<8x32xf32>
    %269 = math.exp %268 : vector<8x32xf32>
    %cst_67 = arith.constant 1.000000e+00 : f32
    %270 = vector.broadcast %cst_67 : f32 to vector<8x32xf32>
    %271 = arith.addf %270, %269 : vector<8x32xf32>
    %272 = arith.divf %270, %271 : vector<8x32xf32>
    %273 = arith.addf %261, %264 : vector<8x32xf32>
    %274 = arith.addf %273, %5 : vector<8x32xf32>
    %275 = arith.negf %274 : vector<8x32xf32>
    %276 = math.exp %275 : vector<8x32xf32>
    %cst_68 = arith.constant 1.000000e+00 : f32
    %277 = vector.broadcast %cst_68 : f32 to vector<8x32xf32>
    %278 = arith.addf %277, %276 : vector<8x32xf32>
    %279 = arith.divf %277, %278 : vector<8x32xf32>
    %280 = arith.mulf %272, %265 : vector<8x32xf32>
    %281 = arith.addf %262, %280 : vector<8x32xf32>
    %282 = arith.addf %281, %6 : vector<8x32xf32>
    %283 = math.tanh %282 : vector<8x32xf32>
    %284 = arith.subf %251, %283 : vector<8x32xf32>
    %285 = arith.mulf %279, %284 : vector<8x32xf32>
    %286 = arith.addf %283, %285 : vector<8x32xf32>
    %c0_69 = arith.constant 0 : index
    %c7_70 = arith.constant 7 : index
    %c0_71 = arith.constant 0 : index
    %287 = vector.load %arg6[%c0_69, %c7_70, %c0_71] : memref<8x8x32xf32, #tpu.memory_space<vmem>>, vector<8x1x32xf32>
    %288 = vector.shape_cast %287 : vector<8x1x32xf32> to vector<8x32xf32>
    %289 = vector.shape_cast %286 : vector<8x32xf32> to vector<8x1x32xf32>
    tpu.vector_store %arg6[%c0_69, %c7_70, %c0_71], %289 {strides = array<i32>} : memref<8x8x32xf32, #tpu.memory_space<vmem>>, vector<8x1x32xf32>,
    %c0_72 = arith.constant 0 : index
    %c0_73 = arith.constant 0 : index
    %290 = vector.load %arg8[%c0_72, %c0_73] : memref<8x32xf32, #tpu.memory_space<vmem>>, vector<8x32xf32>
    tpu.vector_store %arg8[%c0_72, %c0_73], %286 {strides = array<i32>} : memref<8x32xf32, #tpu.memory_space<vmem>>, vector<8x32xf32>,
    %c1_i32 = arith.constant 1 : i32
    %291 = arith.cmpi eq, %arg0, %c1_i32 : i32
    %292 = arith.extui %291 : i1 to i32
    %c0_i32_74 = arith.constant 0 : i32
    %293 = arith.cmpi ne, %292, %c0_i32_74 : i32
    scf.if %293 {
      %c0_75 = arith.constant 0 : index
      %c0_76 = arith.constant 0 : index
      %294 = vector.load %arg7[%c0_75, %c0_76] : memref<8x32xf32, #tpu.memory_space<vmem>>, vector<8x32xf32>
      tpu.vector_store %arg7[%c0_75, %c0_76], %286 {strides = array<i32>} : memref<8x32xf32, #tpu.memory_space<vmem>>, vector<8x32xf32>,
    } else {
    }
    return
  }
  func.func @transform_0(%arg0: i32) -> (i32, i32, i32) {
    %c0_i32 = arith.constant 0 : i32
    %c0_i32_0 = arith.constant 0 : i32
    %c0_i32_1 = arith.constant 0 : i32
    return %arg0, %c0_i32, %c0_i32_0 : i32, i32, i32
  }
  func.func @transform_1(%arg0: i32) -> (i32, i32) {
    %c0_i32 = arith.constant 0 : i32
    %c0_i32_0 = arith.constant 0 : i32
    %c0_i32_1 = arith.constant 0 : i32
    return %c0_i32, %c0_i32_0 : i32, i32
  }
  func.func @transform_2(%arg0: i32) -> (i32, i32) {
    %c0_i32 = arith.constant 0 : i32
    %c0_i32_0 = arith.constant 0 : i32
    %c0_i32_1 = arith.constant 0 : i32
    return %c0_i32, %c0_i32_0 : i32, i32
  }
  func.func @transform_3(%arg0: i32) -> (i32, i32) {
    %c0_i32 = arith.constant 0 : i32
    %c0_i32_0 = arith.constant 0 : i32
    %c0_i32_1 = arith.constant 0 : i32
    return %c0_i32, %c0_i32_0 : i32, i32
  }
  func.func @transform_4(%arg0: i32) -> (i32, i32) {
    %c0_i32 = arith.constant 0 : i32
    %c0_i32_0 = arith.constant 0 : i32
    %c0_i32_1 = arith.constant 0 : i32
    return %c0_i32, %c0_i32_0 : i32, i32
  }
  func.func @transform_5(%arg0: i32) -> (i32, i32, i32) {
    %c0_i32 = arith.constant 0 : i32
    %c0_i32_0 = arith.constant 0 : i32
    %c0_i32_1 = arith.constant 0 : i32
    return %c0_i32, %arg0, %c0_i32_0 : i32, i32, i32
  }
  func.func @transform_6(%arg0: i32) -> (i32, i32) {
    %c0_i32 = arith.constant 0 : i32
    %c0_i32_0 = arith.constant 0 : i32
    %c0_i32_1 = arith.constant 0 : i32
    return %c0_i32, %c0_i32_0 : i32, i32
  }
}

</mosaic_0001>

<llo_original>
// kernel: conditional_gru.1
$region0: #{conditional_gru.1}
  #allocation0 [shape = 'u32[]', space=smem, size = 0x4, offset = 0x4, fixed_abs, tag = 'smem constant byte address 0x4 - core index']
  #allocation1 [shape = 'u32[144,128]{1,0:T(1,128)}', space=vmem, size = 0x12000, scoped, tag = 'internal scratch']
  #allocation2 [shape = 'f32[8,32]{1,0:T(8,128)}', space=vmem, size = 0x1000, scoped, tag = 'scratch operand']
  %s0 = inlined_call_operand.vmem [shape: f32[16,8,96], index: 0, kind: input, shape index: {}]
  %s1 = inlined_call_operand.vmem [shape: f32[8,96], index: 1, kind: input, shape index: {}]
  %s2 = inlined_call_operand.vmem [shape: f32[8,32], index: 2, kind: input, shape index: {}]
  %s3 = inlined_call_operand.vmem [shape: f32[32,96], index: 3, kind: input, shape index: {}]
  %s4 = inlined_call_operand.vmem [shape: f32[1,96], index: 4, kind: input, shape index: {}]
  %s5 = inlined_call_operand.vmem [shape: f32[8,16,32], index: 5, kind: output, shape index: {0}]
  %s6 = inlined_call_operand.vmem [shape: f32[8,32], index: 6, kind: output, shape index: {1}]
  %7 = xla_tuple %s5, %s6
  %s8 = sld [smem:[#allocation0]]
  $region103: #{conditional_gru.1} parent=0
    _
  %s10 = ssub.s32 1, %s8
  %s11 = scalar_select 0, %s10, %s8
  $region1: #{conditional_gru.1} parent=0
    #allocation3 [shape = 'u8[65536]{0}', space=vmem, size = 0x10000, scoped, tag = 'output window, operand 0']
    loop: start=0, step=1, limit=4
    $region2: #{conditional_gru.1} parent=1 // loop_pre_header
      _
    $region3: #{conditional_gru.1} parent=1 // loop_header
      %s13 = sphi 0, %s17
      %p14 = scmp.ge.s32.totalorder %s13, 4
      %s23 = sphi 0, %s25
      %s26 = sphi 0, %s23
      %s27 = sphi 0, %s26
      %s43 = sphi 0, %s27
      %s47 = sphi 0, %s47
      %s49 = sphi 0, %s47
      %s50 = sphi 0, %s49
      %s64 = sphi 0, %s50
      %s68 = sphi 0, %s68
      %s70 = sphi 0, %s68
      %s71 = sphi 0, %s70
      %s85 = sphi 0, %s71
      %s89 = sphi 0, %s89
      %s91 = sphi 0, %s89
      %s92 = sphi 0, %s91
      %s106 = sphi 0, %s92
      %s110 = sphi 0, %s110
      %s112 = sphi 0, %s110
      %s113 = sphi 0, %s112
      %s127 = sphi 0, %s113
      %s133 = sphi 0, %s135
      %s136 = sphi 0, %s133
      %s137 = sphi 0, %s136
      %s153 = sphi 0, %s137
      %s157 = sphi 0, %s157
      %s159 = sphi 0, %s157
      %s160 = sphi 0, %s159
      %s174 = sphi 0, %s160
    $region4: #{conditional_gru.1} parent=1 // loop_header_branch
      %16 = sbr.rel (%p14) target = $region8
    $region5: #{conditional_gru.1} parent=1 // loop_body
      %s18 = ssub.s32 %s13, 1
      %s19 = ssub.s32 %s13, 2
      %s20 = sadd.s32 %s13, 1
      %s21 = ssub.s32 %s13, %s20
      %p22 = scmp.eq.s32.totalorder %s21, 0
      %s24 = sadd.s32 %s23, 1
      %s25 = scalar_select %p22, %s23, %s24
      %p28 = pneg %p22
      %p29 = scmp.eq.s32.totalorder %s13, 1
      %p30 = por %p28, %p29
      %p31 = scmp.ne.s32.totalorder %s23, %s26
      %p32 = scmp.eq.s32.totalorder %s13, 0
      %p33 = por %p31, %p32
      %p34 = scmp.ne.s32.totalorder %s23, %s26
      %p35 = scmp.eq.s32.totalorder %s18, 1
      %p36 = por %p34, %p35
      %p37 = scmp.ne.s32.totalorder %s26, %s27
      %p38 = scmp.eq.s32.totalorder %s18, 0
      %p39 = por %p37, %p38
      %p40 = scmp.ne.s32.totalorder %s26, %s27
      %p41 = scmp.eq.s32.totalorder %s19, 1
      %p42 = por %p40, %p41
      %p44 = scmp.ne.s32.totalorder %s27, %s43
      %p45 = scmp.eq.s32.totalorder %s19, 0
      %p46 = por %p44, %p45
      %s48 = sadd.s32 %s47, 1
      %p51 = scmp.eq.s32.totalorder %s13, 1
      %p52 = scmp.ne.s32.totalorder %s47, %s49
      %p53 = scmp.eq.s32.totalorder %s13, 0
      %p54 = por %p52, %p53
      %p55 = scmp.ne.s32.totalorder %s47, %s49
      %p56 = scmp.eq.s32.totalorder %s18, 1
      %p57 = por %p55, %p56
      %p58 = scmp.ne.s32.totalorder %s49, %s50
      %p59 = scmp.eq.s32.totalorder %s18, 0
      %p60 = por %p58, %p59
      %p61 = scmp.ne.s32.totalorder %s49, %s50
      %p62 = scmp.eq.s32.totalorder %s19, 1
      %p63 = por %p61, %p62
      %p65 = scmp.ne.s32.totalorder %s50, %s64
      %p66 = scmp.eq.s32.totalorder %s19, 0
      %p67 = por %p65, %p66
      %s69 = sadd.s32 %s68, 1
      %p72 = scmp.eq.s32.totalorder %s13, 1
      %p73 = scmp.ne.s32.totalorder %s68, %s70
      %p74 = scmp.eq.s32.totalorder %s13, 0
      %p75 = por %p73, %p74
      %p76 = scmp.ne.s32.totalorder %s68, %s70
      %p77 = scmp.eq.s32.totalorder %s18, 1
      %p78 = por %p76, %p77
      %p79 = scmp.ne.s32.totalorder %s70, %s71
      %p80 = scmp.eq.s32.totalorder %s18, 0
      %p81 = por %p79, %p80
      %p82 = scmp.ne.s32.totalorder %s70, %s71
      %p83 = scmp.eq.s32.totalorder %s19, 1
      %p84 = por %p82, %p83
      %p86 = scmp.ne.s32.totalorder %s71, %s85
      %p87 = scmp.eq.s32.totalorder %s19, 0
      %p88 = por %p86, %p87
      %s90 = sadd.s32 %s89, 1
      %p93 = scmp.eq.s32.totalorder %s13, 1
      %p94 = scmp.ne.s32.totalorder %s89, %s91
      %p95 = scmp.eq.s32.totalorder %s13, 0
      %p96 = por %p94, %p95
      %p97 = scmp.ne.s32.totalorder %s89, %s91
      %p98 = scmp.eq.s32.totalorder %s18, 1
      %p99 = por %p97, %p98
      %p100 = scmp.ne.s32.totalorder %s91, %s92
      %p101 = scmp.eq.s32.totalorder %s18, 0
      %p102 = por %p100, %p101
      %p103 = scmp.ne.s32.totalorder %s91, %s92
      %p104 = scmp.eq.s32.totalorder %s19, 1
      %p105 = por %p103, %p104
      %p107 = scmp.ne.s32.totalorder %s92, %s106
      %p108 = scmp.eq.s32.totalorder %s19, 0
      %p109 = por %p107, %p108
      %s111 = sadd.s32 %s110, 1
      %p114 = scmp.eq.s32.totalorder %s13, 1
      %p115 = scmp.ne.s32.totalorder %s110, %s112
      %p116 = scmp.eq.s32.totalorder %s13, 0
      %p117 = por %p115, %p116
      %p118 = scmp.ne.s32.totalorder %s110, %s112
      %p119 = scmp.eq.s32.totalorder %s18, 1
      %p120 = por %p118, %p119
      %p121 = scmp.ne.s32.totalorder %s112, %s113
      %p122 = scmp.eq.s32.totalorder %s18, 0
      %p123 = por %p121, %p122
      %p124 = scmp.ne.s32.totalorder %s112, %s113
      %p125 = scmp.eq.s32.totalorder %s19, 1
      %p126 = por %p124, %p125
      %p128 = scmp.ne.s32.totalorder %s113, %s127
      %p129 = scmp.eq.s32.totalorder %s19, 0
      %p130 = por %p128, %p129
      %s131 = ssub.s32 %s13, %s20
      %p132 = scmp.eq.s32.totalorder %s131, 0
      %s134 = sadd.s32 %s133, 1
      %s135 = scalar_select %p132, %s133, %s134
      %p138 = pneg %p132
      %p139 = scmp.eq.s32.totalorder %s13, 1
      %p140 = por %p138, %p139
      %p141 = scmp.ne.s32.totalorder %s133, %s136
      %p142 = scmp.eq.s32.totalorder %s13, 0
      %p143 = por %p141, %p142
      %p144 = scmp.ne.s32.totalorder %s133, %s136
      %p145 = scmp.eq.s32.totalorder %s18, 1
      %p146 = por %p144, %p145
      %p147 = scmp.ne.s32.totalorder %s136, %s137
      %p148 = scmp.eq.s32.totalorder %s18, 0
      %p149 = por %p147, %p148
      %p150 = scmp.ne.s32.totalorder %s136, %s137
      %p151 = scmp.eq.s32.totalorder %s19, 1
      %p152 = por %p150, %p151
      %p154 = scmp.ne.s32.totalorder %s137, %s153
      %p155 = scmp.eq.s32.totalorder %s19, 0
      %p156 = por %p154, %p155
      %s158 = sadd.s32 %s157, 1
      %p161 = scmp.eq.s32.totalorder %s13, 1
      %p162 = scmp.ne.s32.totalorder %s157, %s159
      %p163 = scmp.eq.s32.totalorder %s13, 0
      %p164 = por %p162, %p163
      %p165 = scmp.ne.s32.totalorder %s157, %s159
      %p166 = scmp.eq.s32.totalorder %s18, 1
      %p167 = por %p165, %p166
      %p168 = scmp.ne.s32.totalorder %s159, %s160
      %p169 = scmp.eq.s32.totalorder %s18, 0
      %p170 = por %p168, %p169
      %p171 = scmp.ne.s32.totalorder %s159, %s160
      %p172 = scmp.eq.s32.totalorder %s19, 1
      %p173 = por %p171, %p172
      %p175 = scmp.ne.s32.totalorder %s160, %s174
      %p176 = scmp.eq.s32.totalorder %s19, 0
      %p177 = por %p175, %p176
      %p178 = scmp.le.s32.totalorder 1, %s13
      %p179 = scmp.lt.s32.totalorder %s13, 3
      %p180 = pnand %p178, %p179
      %p181 = pneg %p180
      // Predicated region
      $region9: #{conditional_gru.1} parent=5 // pred_check
        _
      $region10: #{conditional_gru.1} parent=5 // pred_check_branch
        %183 = sbr.rel (%p180) target = $region12
      $region11: #{conditional_gru.1} parent=5 // pred_region
        %s184 = ssub.s32 %s13, 1
        // Predicated region
        $region13: #{conditional_gru.1} parent=11 // pred_check
          %p185 = pneg %p60
        $region14: #{conditional_gru.1} parent=11 // pred_check_branch
          %187 = sbr.rel (%p185) target = $region16
        $region15: #{conditional_gru.1} parent=11 // pred_region
          _
        $region16: #{conditional_gru.1} parent=11 // pred_fallthru
          _
        // Predicated region
        $region17: #{conditional_gru.1} parent=11 // pred_check
          %p188 = pneg %p81
        $region18: #{conditional_gru.1} parent=11 // pred_check_branch
          %190 = sbr.rel (%p188) target = $region20
        $region19: #{conditional_gru.1} parent=11 // pred_region
          _
        $region20: #{conditional_gru.1} parent=11 // pred_fallthru
          _
        // Predicated region
        $region21: #{conditional_gru.1} parent=11 // pred_check
          %p191 = pneg %p102
        $region22: #{conditional_gru.1} parent=11 // pred_check_branch
          %193 = sbr.rel (%p191) target = $region24
        $region23: #{conditional_gru.1} parent=11 // pred_region
          _
        $region24: #{conditional_gru.1} parent=11 // pred_fallthru
          _
        // Predicated region
        $region25: #{conditional_gru.1} parent=11 // pred_check
          %p194 = pneg %p123
        $region26: #{conditional_gru.1} parent=11 // pred_check_branch
          %196 = sbr.rel (%p194) target = $region28
        $region27: #{conditional_gru.1} parent=11 // pred_region
          _
        $region28: #{conditional_gru.1} parent=11 // pred_fallthru
          _
      $region12: #{conditional_gru.1} parent=5 // pred_fallthru
        _
      %p197 = scmp.lt.s32.totalorder %s13, 2
      // Predicated region
      $region29: #{conditional_gru.1} parent=5 // pred_check
        %p198 = pneg %p197
      $region30: #{conditional_gru.1} parent=5 // pred_check_branch
        %200 = sbr.rel (%p198) target = $region32
      $region31: #{conditional_gru.1} parent=5 // pred_region
        // Predicated region
        $region33: #{conditional_gru.1} parent=31 // pred_check
          %p201 = pneg %p33
        $region34: #{conditional_gru.1} parent=31 // pred_check_branch
          %203 = sbr.rel (%p201) target = $region36
        $region35: #{conditional_gru.1} parent=31 // pred_region
          %s204 = smul.u32 8, %s13
          %p205 = scmp.lt.s32.totalorder %s204, 15
          %s206 = scalar_select %p205, %s204, 15
          %s207 = smul.addr %s206, 8
          %s208 = scalar_lea.vmem %s0, %s207
          %s209 = smul.u32 8, %s13
        $region36: #{conditional_gru.1} parent=31 // pred_fallthru
          _
      $region32: #{conditional_gru.1} parent=5 // pred_fallthru
        _
      %p210 = scmp.le.s32.totalorder 1, %s13
      %p211 = scmp.lt.s32.totalorder %s13, 3
      %p212 = pnand %p210, %p211
      %p213 = pneg %p212
      // Predicated region
      $region37: #{conditional_gru.1} parent=5 // pred_check
        _
      $region38: #{conditional_gru.1} parent=5 // pred_check_branch
        %215 = sbr.rel (%p212) target = $region40
      $region39: #{conditional_gru.1} parent=5 // pred_region
        %s216 = ssub.s32 %s13, 1
        %s217 = smul.u32 8, %s18
        %p218 = scmp.lt.s32.totalorder %s217, 15
        %s219 = scalar_select %p218, %s217, 15
        %s220 = smul.addr %s219, 8
        %s221 = scalar_lea.vmem %s0, %s220
        %p222 = pneg %p39
        %p223 = pneg %p36
        %p224 = pneg %p60
        %p225 = pneg %p57
        %p226 = pneg %p81
        %p227 = pneg %p78
        %p228 = pneg %p102
        %p229 = pneg %p99
        %p230 = pneg %p123
        %p231 = pneg %p120
        %p232 = pneg %p149
        %p233 = pneg %p146
        %s234 = sand.u32 %s136, 1
        %s235 = sand.u32 %s136, 1
        %s236 = smul.addr %s235, 64
        %s237 = scalar_lea.vmem [#allocation3], %s236
        %p238 = pneg %p170
        %p239 = pneg %p167
        %s240 = smul.u32 8, %s18
        %p241 = scmp.lt.s32.totalorder %s240, 15
        %s242 = scalar_select %p241, %s240, 15
        %s243 = smul.addr %s242, 8
        %s244 = scalar_lea.vmem %s0, %s243
        %s245 = smul.u32 8, %s18
        %p246 = scmp.eq.s32.totalorder %s18, 0
        // Predicated region
        $region41: #{conditional_gru.1} parent=39 // pred_check
          %p247 = pneg %p246
        $region42: #{conditional_gru.1} parent=39 // pred_check_branch
          %249 = sbr.rel (%p247) target = $region44
        $region43: #{conditional_gru.1} parent=39 // pred_region
          %v250 = vld [vmem:[%s2] sm:$0xff]
          %vm251 = vcmask 261120
          %252 = vst.msk [vmem:[#allocation2] sm:$0xff] %vm251, %v250
        $region44: #{conditional_gru.1} parent=39 // pred_fallthru
          _
        %v253 = vld [vmem:[%s1] sm:$0xff]
        %v254 = vld [vmem:[%s3] sm:$0xff]
        %v255 = vld [vmem:[%s3 + $0x8] sm:$0xff]
        %v256 = vld [vmem:[%s3 + $0x10] sm:$0xff]
        %v257 = vld [vmem:[%s3 + $0x18] sm:$0xff]
        %v258 = vld [vmem:[%s4] sm:$0x1]
        %v259 = vld [vmem:[#allocation2] sm:$0xff]
        %v260 = vld [vmem:[%s244] sm:$0xff]
        %v262 = vlaneseq
        %v263 = vshrl.u32 %v262, 7
        %v264 = vsub.s32 0, %v263
        %v265 = vrot.slane %v258, %v264
        %vm267 = vcmask 261120
        %v269 = vsel %vm267, %v259, 0
        %271 = vmatprep.subr.mxu0 0.0
        %272 = vmatpush1.msra.mxu0 0.0
        %273 = vmatprep.subr.mxu0 0.0
        %274 = vmatpush1.msra.mxu0 0.0
        %275 = vmatprep.subr.mxu0 0.0
        %276 = vmatpush1.msra.mxu0 0.0
        %277 = vmatprep.subr.mxu0 0.0
        %278 = vmatpush1.msra.mxu0 0.0
        %279 = vmatprep.subr.mxu0 0.0
        %280 = vmatpush1.msra.mxu0 0.0
        %281 = vmatprep.subr.mxu0 0.0
        %282 = vmatpush1.msra.mxu0 0.0
        %283 = vmatprep.subr.mxu0 0.0
        %284 = vmatpush1.msra.mxu0 0.0
        %285 = vmatprep.subr.mxu0 0.0
        %286 = vmatpush1.msra.mxu0 0.0
        %287 = vmatprep.subr.mxu0 0.0
        %288 = vmatpush1.msra.mxu0 0.0
        %289 = vmatprep.subr.mxu0 0.0
        %290 = vmatpush1.msra.mxu0 0.0
        %291 = vmatprep.subr.mxu0 0.0
        %292 = vmatpush1.msra.mxu0 0.0
        %293 = vmatprep.subr.mxu0 0.0
        %294 = vmatpush1.msra.mxu0 0.0
        %295 = vmatprep.subr.mxu0 0.0
        %296 = vmatpush1.msra.mxu0 %v257
        %297 = vmatprep.subr.mxu0 0.0
        %298 = vmatpush1.msra.mxu0 %v256
        %299 = vmatprep.subr.mxu0 0.0
        %300 = vmatpush1.msra.mxu0 %v255
        %301 = vmatprep.subr.mxu0 0.0
        %302 = vmatpush1.msra.mxu0 %v254
        %303 = vmatprep.subr.mxu0 0.0
        %304 = vmatpush2.msra.mxu0 0.0
        %305 = vmatprep.subr.mxu0 0.0
        %306 = vmatpush2.msra.mxu0 0.0
        %307 = vmatprep.subr.mxu0 0.0
        %308 = vmatpush2.msra.mxu0 0.0
        %309 = vmatprep.subr.mxu0 0.0
        %310 = vmatpush2.msra.mxu0 0.0
        %311 = vmatprep.subr.mxu0 0.0
        %312 = vmatpush2.msra.mxu0 0.0
        %313 = vmatprep.subr.mxu0 0.0
        %314 = vmatpush2.msra.mxu0 0.0
        %315 = vmatprep.subr.mxu0 0.0
        %316 = vmatpush2.msra.mxu0 0.0
        %317 = vmatprep.subr.mxu0 0.0
        %318 = vmatpush2.msra.mxu0 0.0
        %319 = vmatprep.subr.mxu0 0.0
        %320 = vmatpush2.msra.mxu0 0.0
        %321 = vmatprep.subr.mxu0 0.0
        %322 = vmatpush2.msra.mxu0 0.0
        %323 = vmatprep.subr.mxu0 0.0
        %324 = vmatpush2.msra.mxu0 0.0
        %325 = vmatprep.subr.mxu0 0.0
        %326 = vmatpush2.msra.mxu0 0.0
        %327 = vmatprep.subr.mxu0 0.0
        %328 = vmatpush2.msra.mxu0 0.0
        %329 = vmatprep.subr.mxu0 0.0
        %330 = vmatpush2.msra.mxu0 0.0
        %331 = vmatprep.subr.mxu0 0.0
        %332 = vmatpush2.msra.mxu0 0.0
        %333 = vmatprep.subr.mxu0 0.0
        %334 = vmatpush2.msra.mxu0 0.0
        %335 = vmatprep.mubr.f32.mxu0 0.0
        %336 = vmatmul.mubr.f32.gmra.mxu0 %v269
        %v337 = vpop.f32.mrf.mxu0
        %v338 = vadd.f32 %v265, %v337
        %v339 = vpop.f32.mrf.mxu0
        %340 = vdwg.mxu0
        %v341 = vadd.f32 %v260, %v338
        %v342 = vadd.f32 %v341, %v253
        %v343 = vxor.u32 %v342, 2147483648
        %v344 = vmul.f32 %v343, 1.442695
        %v345 = vpow.pop %v344
        %v346 = vadd.f32 %v345, 1.0
        %v347 = vrcp.pop %v346
        %v348 = vmul.f32 1.0, %v347
        %350 = vrot.lane.b32.xlu0 %v338, 64
        %v351 = vpop.permute.xlu0 %350
        %v353 = vmul.f32 %v348, %v351
        %355 = vrot.lane.b32.xlu0 %v353, 64
        %v356 = vpop.permute.xlu0 %355
        %v358 = vadd.f32 %v260, %v356
        %v359 = vadd.f32 %v358, %v253
        %v360 = vtanh.pop %v359
        %362 = vrot.lane.b32.xlu0 %v360, 64
        %v363 = vpop.permute.xlu0 %362
        %v365 = vsub.f32 %v259, %v363
        %367 = vrot.lane.b32.xlu0 %v365, 32
        %v368 = vpop.permute.xlu0 %367
        %v370 = vmul.f32 %v348, %v368
        %372 = vrot.lane.b32.xlu0 %v370, 32
        %v373 = vpop.permute.xlu0 %372
        %v375 = vadd.f32 %v360, %v373
        %v377 = vcombine.high %v375, %v375
        %v379 = vunpack.c.l.s4 1966171168
        %v380 = vunpack.c.0.s8 %v379
        %v381 = vlaneseq
        %v382 = vshrl.u32 %v381, 7
        %v383 = vsub.s32 %v380, %v382
        %v384 = vrot.slane %v375, %v383
        %v386 = vunpack.c.l.s4 1966171168
        %v387 = vunpack.c.0.s8 %v386
        %v388 = vlaneseq
        %v389 = vshrl.u32 %v388, 7
        %v390 = vsub.s32 %v387, %v389
        %v391 = vrot.slane %v377, %v390
        %v392 = vcombine.high %v384, %v384
        %v393 = vcombine.high %v391, %v391
        %v395 = vunpack.c.l.s4 1966171168
        %v396 = vunpack.c.0.s8 %v395
        %v397 = vlaneseq
        %v398 = vshrl.u32 %v397, 7
        %v399 = vsub.s32 %v396, %v398
        %v400 = vrot.slane %v384, %v399
        %v402 = vunpack.c.l.s4 1966171168
        %v403 = vunpack.c.0.s8 %v402
        %v404 = vlaneseq
        %v405 = vshrl.u32 %v404, 7
        %v406 = vsub.s32 %v403, %v405
        %v407 = vrot.slane %v391, %v406
        %v409 = vunpack.c.l.s4 1966171168
        %v410 = vunpack.c.0.s8 %v409
        %v411 = vlaneseq
        %v412 = vshrl.u32 %v411, 7
        %v413 = vsub.s32 %v410, %v412
        %v414 = vrot.slane %v392, %v413
        %v416 = vunpack.c.l.s4 1966171168
        %v417 = vunpack.c.0.s8 %v416
        %v418 = vlaneseq
        %v419 = vshrl.u32 %v418, 7
        %v420 = vsub.s32 %v417, %v419
        %v421 = vrot.slane %v393, %v420
        %v422 = vcombine.high %v400, %v400
        %v423 = vcombine.high %v407, %v407
        %v424 = vcombine.high %v414, %v414
        %v425 = vcombine.high %v421, %v421
        %v426 = vlaneseq
        %v427 = vshrl.u32 %v426, 7
        %v428 = vsub.s32 0, %v427
        %v429 = vrot.slane %v400, %v428
        %v430 = vlaneseq
        %v431 = vshrl.u32 %v430, 7
        %v432 = vsub.s32 0, %v431
        %v433 = vrot.slane %v414, %v432
        %v434 = vlaneseq
        %v435 = vshrl.u32 %v434, 7
        %v436 = vsub.s32 0, %v435
        %v437 = vrot.slane %v422, %v436
        %v438 = vlaneseq
        %v439 = vshrl.u32 %v438, 7
        %v440 = vsub.s32 0, %v439
        %v441 = vrot.slane %v424, %v440
        %v442 = vlaneseq
        %v443 = vshrl.u32 %v442, 7
        %v444 = vsub.s32 0, %v443
        %v445 = vrot.slane %v407, %v444
        %v446 = vlaneseq
        %v447 = vshrl.u32 %v446, 7
        %v448 = vsub.s32 0, %v447
        %v449 = vrot.slane %v421, %v448
        %v450 = vlaneseq
        %v451 = vshrl.u32 %v450, 7
        %v452 = vsub.s32 0, %v451
        %v453 = vrot.slane %v423, %v452
        %v454 = vlaneseq
        %v455 = vshrl.u32 %v454, 7
        %v456 = vsub.s32 0, %v455
        %v457 = vrot.slane %v425, %v456
        %458 = vrot.lane.b32.xlu0 %v429, 64
        %v459 = vpop.permute.xlu0 %458
        %460 = vrot.lane.b32.xlu0 %v433, 64
        %v461 = vpop.permute.xlu0 %460
        %462 = vrot.lane.b32.xlu0 %v437, 64
        %v463 = vpop.permute.xlu0 %462
        %464 = vrot.lane.b32.xlu0 %v441, 64
        %v465 = vpop.permute.xlu0 %464
        %466 = vrot.lane.b32.xlu0 %v445, 64
        %v467 = vpop.permute.xlu0 %466
        %468 = vrot.lane.b32.xlu0 %v449, 64
        %v469 = vpop.permute.xlu0 %468
        %470 = vrot.lane.b32.xlu0 %v453, 64
        %v471 = vpop.permute.xlu0 %470
        %472 = vrot.lane.b32.xlu0 %v457, 64
        %v473 = vpop.permute.xlu0 %472
        %vm482 = vcmask 253952
        %483 = vst.msk [vmem:[%s237] sm:$0x1] %vm482, %v459
        %484 = vst.msk [vmem:[%s237 + $0x8] sm:$0x1] %vm482, %v461
        %485 = vst.msk [vmem:[%s237 + $0x10] sm:$0x1] %vm482, %v463
        %486 = vst.msk [vmem:[%s237 + $0x18] sm:$0x1] %vm482, %v465
        %487 = vst.msk [vmem:[%s237 + $0x20] sm:$0x1] %vm482, %v467
        %488 = vst.msk [vmem:[%s237 + $0x28] sm:$0x1] %vm482, %v469
        %489 = vst.msk [vmem:[%s237 + $0x30] sm:$0x1] %vm482, %v471
        %490 = vst.msk [vmem:[%s237 + $0x38] sm:$0x1] %vm482, %v473
        %s491 = scalar_lea.vmem %s244, 8
        %v492 = vld [vmem:[%s491] sm:$0xff]
        %493 = vrot.lane.b32.xlu0 %v375, 64
        %v494 = vpop.permute.xlu0 %493
        %v495 = vsel %vm267, %v494, 0
        %497 = vmatprep.subr.mxu0 0.0
        %498 = vmatpush1.msra.mxu0 0.0
        %499 = vmatprep.subr.mxu0 0.0
        %500 = vmatpush1.msra.mxu0 0.0
        %501 = vmatprep.subr.mxu0 0.0
        %502 = vmatpush1.msra.mxu0 0.0
        %503 = vmatprep.subr.mxu0 0.0
        %504 = vmatpush1.msra.mxu0 0.0
        %505 = vmatprep.subr.mxu0 0.0
        %506 = vmatpush1.msra.mxu0 0.0
        %507 = vmatprep.subr.mxu0 0.0
        %508 = vmatpush1.msra.mxu0 0.0
        %509 = vmatprep.subr.mxu0 0.0
        %510 = vmatpush1.msra.mxu0 0.0
        %511 = vmatprep.subr.mxu0 0.0
        %512 = vmatpush1.msra.mxu0 0.0
        %513 = vmatprep.subr.mxu0 0.0
        %514 = vmatpush1.msra.mxu0 0.0
        %515 = vmatprep.subr.mxu0 0.0
        %516 = vmatpush1.msra.mxu0 0.0
        %517 = vmatprep.subr.mxu0 0.0
        %518 = vmatpush1.msra.mxu0 0.0
        %519 = vmatprep.subr.mxu0 0.0
        %520 = vmatpush1.msra.mxu0 0.0
        %521 = vmatprep.subr.mxu0 0.0
        %522 = vmatpush1.msra.mxu0 %v257
        %523 = vmatprep.subr.mxu0 0.0
        %524 = vmatpush1.msra.mxu0 %v256
        %525 = vmatprep.subr.mxu0 0.0
        %526 = vmatpush1.msra.mxu0 %v255
        %527 = vmatprep.subr.mxu0 0.0
        %528 = vmatpush1.msra.mxu0 %v254
        %529 = vmatprep.subr.mxu0 0.0
        %530 = vmatpush2.msra.mxu0 0.0
        %531 = vmatprep.subr.mxu0 0.0
        %532 = vmatpush2.msra.mxu0 0.0
        %533 = vmatprep.subr.mxu0 0.0
        %534 = vmatpush2.msra.mxu0 0.0
        %535 = vmatprep.subr.mxu0 0.0
        %536 = vmatpush2.msra.mxu0 0.0
        %537 = vmatprep.subr.mxu0 0.0
        %538 = vmatpush2.msra.mxu0 0.0
        %539 = vmatprep.subr.mxu0 0.0
        %540 = vmatpush2.msra.mxu0 0.0
        %541 = vmatprep.subr.mxu0 0.0
        %542 = vmatpush2.msra.mxu0 0.0
        %543 = vmatprep.subr.mxu0 0.0
        %544 = vmatpush2.msra.mxu0 0.0
        %545 = vmatprep.subr.mxu0 0.0
        %546 = vmatpush2.msra.mxu0 0.0
        %547 = vmatprep.subr.mxu0 0.0
        %548 = vmatpush2.msra.mxu0 0.0
        %549 = vmatprep.subr.mxu0 0.0
        %550 = vmatpush2.msra.mxu0 0.0
        %551 = vmatprep.subr.mxu0 0.0
        %552 = vmatpush2.msra.mxu0 0.0
        %553 = vmatprep.subr.mxu0 0.0
        %554 = vmatpush2.msra.mxu0 0.0
        %555 = vmatprep.subr.mxu0 0.0
        %556 = vmatpush2.msra.mxu0 0.0
        %557 = vmatprep.subr.mxu0 0.0
        %558 = vmatpush2.msra.mxu0 0.0
        %559 = vmatprep.subr.mxu0 0.0
        %560 = vmatpush2.msra.mxu0 0.0
        %561 = vmatprep.mubr.f32.mxu0 0.0
        %562 = vmatmul.mubr.f32.gmra.mxu0 %v495
        %v563 = vpop.f32.mrf.mxu0
        %v564 = vadd.f32 %v265, %v563
        %v565 = vpop.f32.mrf.mxu0
        %566 = vdwg.mxu0
        %v567 = vadd.f32 %v492, %v564
        %v568 = vadd.f32 %v567, %v253
        %v569 = vxor.u32 %v568, 2147483648
        %v570 = vmul.f32 %v569, 1.442695
        %v571 = vpow.pop %v570
        %v572 = vadd.f32 %v571, 1.0
        %v573 = vrcp.pop %v572
        %v574 = vmul.f32 1.0, %v573
        %576 = vrot.lane.b32.xlu0 %v564, 64
        %v577 = vpop.permute.xlu0 %576
        %v579 = vmul.f32 %v574, %v577
        %581 = vrot.lane.b32.xlu0 %v579, 64
        %v582 = vpop.permute.xlu0 %581
        %v584 = vadd.f32 %v492, %v582
        %v585 = vadd.f32 %v584, %v253
        %v586 = vtanh.pop %v585
        %v587 = vsub.f32 %v375, %v586
        %589 = vrot.lane.b32.xlu0 %v587, 96
        %v590 = vpop.permute.xlu0 %589
        %v592 = vmul.f32 %v574, %v590
        %594 = vrot.lane.b32.xlu0 %v592, 32
        %v595 = vpop.permute.xlu0 %594
        %v597 = vadd.f32 %v586, %v595
        %v599 = vcombine.high %v597, %v597
        %v601 = vunpack.c.l.s4 1966171168
        %v602 = vunpack.c.0.s8 %v601
        %v603 = vlaneseq
        %v604 = vshrl.u32 %v603, 7
        %v605 = vsub.s32 %v602, %v604
        %v606 = vrot.slane %v597, %v605
        %v608 = vunpack.c.l.s4 1966171168
        %v609 = vunpack.c.0.s8 %v608
        %v610 = vlaneseq
        %v611 = vshrl.u32 %v610, 7
        %v612 = vsub.s32 %v609, %v611
        %v613 = vrot.slane %v599, %v612
        %v614 = vcombine.high %v606, %v606
        %v615 = vcombine.high %v613, %v613
        %v617 = vunpack.c.l.s4 1966171168
        %v618 = vunpack.c.0.s8 %v617
        %v619 = vlaneseq
        %v620 = vshrl.u32 %v619, 7
        %v621 = vsub.s32 %v618, %v620
        %v622 = vrot.slane %v606, %v621
        %v624 = vunpack.c.l.s4 1966171168
        %v625 = vunpack.c.0.s8 %v624
        %v626 = vlaneseq
        %v627 = vshrl.u32 %v626, 7
        %v628 = vsub.s32 %v625, %v627
        %v629 = vrot.slane %v613, %v628
        %v631 = vunpack.c.l.s4 1966171168
        %v632 = vunpack.c.0.s8 %v631
        %v633 = vlaneseq
        %v634 = vshrl.u32 %v633, 7
        %v635 = vsub.s32 %v632, %v634
        %v636 = vrot.slane %v614, %v635
        %v638 = vunpack.c.l.s4 1966171168
        %v639 = vunpack.c.0.s8 %v638
        %v640 = vlaneseq
        %v641 = vshrl.u32 %v640, 7
        %v642 = vsub.s32 %v639, %v641
        %v643 = vrot.slane %v615, %v642
        %v644 = vcombine.high %v622, %v622
        %v645 = vcombine.high %v629, %v629
        %v646 = vcombine.high %v636, %v636
        %v647 = vcombine.high %v643, %v643
        %v648 = vlaneseq
        %v649 = vshrl.u32 %v648, 7
        %v650 = vsub.s32 0, %v649
        %v651 = vrot.slane %v622, %v650
        %v652 = vlaneseq
        %v653 = vshrl.u32 %v652, 7
        %v654 = vsub.s32 0, %v653
        %v655 = vrot.slane %v636, %v654
        %v656 = vlaneseq
        %v657 = vshrl.u32 %v656, 7
        %v658 = vsub.s32 0, %v657
        %v659 = vrot.slane %v644, %v658
        %v660 = vlaneseq
        %v661 = vshrl.u32 %v660, 7
        %v662 = vsub.s32 0, %v661
        %v663 = vrot.slane %v646, %v662
        %v664 = vlaneseq
        %v665 = vshrl.u32 %v664, 7
        %v666 = vsub.s32 0, %v665
        %v667 = vrot.slane %v629, %v666
        %v668 = vlaneseq
        %v669 = vshrl.u32 %v668, 7
        %v670 = vsub.s32 0, %v669
        %v671 = vrot.slane %v643, %v670
        %v672 = vlaneseq
        %v673 = vshrl.u32 %v672, 7
        %v674 = vsub.s32 0, %v673
        %v675 = vrot.slane %v645, %v674
        %v676 = vlaneseq
        %v677 = vshrl.u32 %v676, 7
        %v678 = vsub.s32 0, %v677
        %v679 = vrot.slane %v647, %v678
        %680 = vrot.lane.b32.xlu0 %v651, 64
        %v681 = vpop.permute.xlu0 %680
        %682 = vrot.lane.b32.xlu0 %v655, 64
        %v683 = vpop.permute.xlu0 %682
        %684 = vrot.lane.b32.xlu0 %v659, 64
        %v685 = vpop.permute.xlu0 %684
        %686 = vrot.lane.b32.xlu0 %v663, 64
        %v687 = vpop.permute.xlu0 %686
        %688 = vrot.lane.b32.xlu0 %v667, 64
        %v689 = vpop.permute.xlu0 %688
        %690 = vrot.lane.b32.xlu0 %v671, 64
        %v691 = vpop.permute.xlu0 %690
        %692 = vrot.lane.b32.xlu0 %v675, 64
        %v693 = vpop.permute.xlu0 %692
        %694 = vrot.lane.b32.xlu0 %v679, 64
        %v695 = vpop.permute.xlu0 %694
        %704 = vst.msk [vmem:[%s237 + $0x1] sm:$0x1] %vm482, %v681
        %705 = vst.msk [vmem:[%s237 + $0x9] sm:$0x1] %vm482, %v683
        %706 = vst.msk [vmem:[%s237 + $0x11] sm:$0x1] %vm482, %v685
        %707 = vst.msk [vmem:[%s237 + $0x19] sm:$0x1] %vm482, %v687
        %708 = vst.msk [vmem:[%s237 + $0x21] sm:$0x1] %vm482, %v689
        %709 = vst.msk [vmem:[%s237 + $0x29] sm:$0x1] %vm482, %v691
        %710 = vst.msk [vmem:[%s237 + $0x31] sm:$0x1] %vm482, %v693
        %711 = vst.msk [vmem:[%s237 + $0x39] sm:$0x1] %vm482, %v695
        %s712 = scalar_lea.vmem %s244, 16
        %v713 = vld [vmem:[%s712] sm:$0xff]
        %714 = vrot.lane.b32.xlu0 %v597, 64
        %v715 = vpop.permute.xlu0 %714
        %v716 = vsel %vm267, %v715, 0
        %718 = vmatprep.subr.mxu0 0.0
        %719 = vmatpush1.msra.mxu0 0.0
        %720 = vmatprep.subr.mxu0 0.0
        %721 = vmatpush1.msra.mxu0 0.0
        %722 = vmatprep.subr.mxu0 0.0
        %723 = vmatpush1.msra.mxu0 0.0
        %724 = vmatprep.subr.mxu0 0.0
        %725 = vmatpush1.msra.mxu0 0.0
        %726 = vmatprep.subr.mxu0 0.0
        %727 = vmatpush1.msra.mxu0 0.0
        %728 = vmatprep.subr.mxu0 0.0
        %729 = vmatpush1.msra.mxu0 0.0
        %730 = vmatprep.subr.mxu0 0.0
        %731 = vmatpush1.msra.mxu0 0.0
        %732 = vmatprep.subr.mxu0 0.0
        %733 = vmatpush1.msra.mxu0 0.0
        %734 = vmatprep.subr.mxu0 0.0
        %735 = vmatpush1.msra.mxu0 0.0
        %736 = vmatprep.subr.mxu0 0.0
        %737 = vmatpush1.msra.mxu0 0.0
        %738 = vmatprep.subr.mxu0 0.0
        %739 = vmatpush1.msra.mxu0 0.0
        %740 = vmatprep.subr.mxu0 0.0
        %741 = vmatpush1.msra.mxu0 0.0
        %742 = vmatprep.subr.mxu0 0.0
        %743 = vmatpush1.msra.mxu0 %v257
        %744 = vmatprep.subr.mxu0 0.0
        %745 = vmatpush1.msra.mxu0 %v256
        %746 = vmatprep.subr.mxu0 0.0
        %747 = vmatpush1.msra.mxu0 %v255
        %748 = vmatprep.subr.mxu0 0.0
        %749 = vmatpush1.msra.mxu0 %v254
        %750 = vmatprep.subr.mxu0 0.0
        %751 = vmatpush2.msra.mxu0 0.0
        %752 = vmatprep.subr.mxu0 0.0
        %753 = vmatpush2.msra.mxu0 0.0
        %754 = vmatprep.subr.mxu0 0.0
        %755 = vmatpush2.msra.mxu0 0.0
        %756 = vmatprep.subr.mxu0 0.0
        %757 = vmatpush2.msra.mxu0 0.0
        %758 = vmatprep.subr.mxu0 0.0
        %759 = vmatpush2.msra.mxu0 0.0
        %760 = vmatprep.subr.mxu0 0.0
        %761 = vmatpush2.msra.mxu0 0.0
        %762 = vmatprep.subr.mxu0 0.0
        %763 = vmatpush2.msra.mxu0 0.0
        %764 = vmatprep.subr.mxu0 0.0
        %765 = vmatpush2.msra.mxu0 0.0
        %766 = vmatprep.subr.mxu0 0.0
        %767 = vmatpush2.msra.mxu0 0.0
        %768 = vmatprep.subr.mxu0 0.0
        %769 = vmatpush2.msra.mxu0 0.0
        %770 = vmatprep.subr.mxu0 0.0
        %771 = vmatpush2.msra.mxu0 0.0
        %772 = vmatprep.subr.mxu0 0.0
        %773 = vmatpush2.msra.mxu0 0.0
        %774 = vmatprep.subr.mxu0 0.0
        %775 = vmatpush2.msra.mxu0 0.0
        %776 = vmatprep.subr.mxu0 0.0
        %777 = vmatpush2.msra.mxu0 0.0
        %778 = vmatprep.subr.mxu0 0.0
        %779 = vmatpush2.msra.mxu0 0.0
        %780 = vmatprep.subr.mxu0 0.0
        %781 = vmatpush2.msra.mxu0 0.0
        %782 = vmatprep.mubr.f32.mxu0 0.0
        %783 = vmatmul.mubr.f32.gmra.mxu0 %v716
        %v784 = vpop.f32.mrf.mxu0
        %v785 = vadd.f32 %v265, %v784
        %v786 = vpop.f32.mrf.mxu0
        %787 = vdwg.mxu0
        %v788 = vadd.f32 %v713, %v785
        %v789 = vadd.f32 %v788, %v253
        %v790 = vxor.u32 %v789, 2147483648
        %v791 = vmul.f32 %v790, 1.442695
        %v792 = vpow.pop %v791
        %v793 = vadd.f32 %v792, 1.0
        %v794 = vrcp.pop %v793
        %v795 = vmul.f32 1.0, %v794
        %797 = vrot.lane.b32.xlu0 %v785, 64
        %v798 = vpop.permute.xlu0 %797
        %v800 = vmul.f32 %v795, %v798
        %802 = vrot.lane.b32.xlu0 %v800, 64
        %v803 = vpop.permute.xlu0 %802
        %v805 = vadd.f32 %v713, %v803
        %v806 = vadd.f32 %v805, %v253
        %v807 = vtanh.pop %v806
        %v808 = vsub.f32 %v597, %v807
        %810 = vrot.lane.b32.xlu0 %v808, 96
        %v811 = vpop.permute.xlu0 %810
        %v813 = vmul.f32 %v795, %v811
        %815 = vrot.lane.b32.xlu0 %v813, 32
        %v816 = vpop.permute.xlu0 %815
        %v818 = vadd.f32 %v807, %v816
        %v820 = vcombine.high %v818, %v818
        %v822 = vunpack.c.l.s4 1966171168
        %v823 = vunpack.c.0.s8 %v822
        %v824 = vlaneseq
        %v825 = vshrl.u32 %v824, 7
        %v826 = vsub.s32 %v823, %v825
        %v827 = vrot.slane %v818, %v826
        %v829 = vunpack.c.l.s4 1966171168
        %v830 = vunpack.c.0.s8 %v829
        %v831 = vlaneseq
        %v832 = vshrl.u32 %v831, 7
        %v833 = vsub.s32 %v830, %v832
        %v834 = vrot.slane %v820, %v833
        %v835 = vcombine.high %v827, %v827
        %v836 = vcombine.high %v834, %v834
        %v838 = vunpack.c.l.s4 1966171168
        %v839 = vunpack.c.0.s8 %v838
        %v840 = vlaneseq
        %v841 = vshrl.u32 %v840, 7
        %v842 = vsub.s32 %v839, %v841
        %v843 = vrot.slane %v827, %v842
        %v845 = vunpack.c.l.s4 1966171168
        %v846 = vunpack.c.0.s8 %v845
        %v847 = vlaneseq
        %v848 = vshrl.u32 %v847, 7
        %v849 = vsub.s32 %v846, %v848
        %v850 = vrot.slane %v834, %v849
        %v852 = vunpack.c.l.s4 1966171168
        %v853 = vunpack.c.0.s8 %v852
        %v854 = vlaneseq
        %v855 = vshrl.u32 %v854, 7
        %v856 = vsub.s32 %v853, %v855
        %v857 = vrot.slane %v835, %v856
        %v859 = vunpack.c.l.s4 1966171168
        %v860 = vunpack.c.0.s8 %v859
        %v861 = vlaneseq
        %v862 = vshrl.u32 %v861, 7
        %v863 = vsub.s32 %v860, %v862
        %v864 = vrot.slane %v836, %v863
        %v865 = vcombine.high %v843, %v843
        %v866 = vcombine.high %v850, %v850
        %v867 = vcombine.high %v857, %v857
        %v868 = vcombine.high %v864, %v864
        %v869 = vlaneseq
        %v870 = vshrl.u32 %v869, 7
        %v871 = vsub.s32 0, %v870
        %v872 = vrot.slane %v843, %v871
        %v873 = vlaneseq
        %v874 = vshrl.u32 %v873, 7
        %v875 = vsub.s32 0, %v874
        %v876 = vrot.slane %v857, %v875
        %v877 = vlaneseq
        %v878 = vshrl.u32 %v877, 7
        %v879 = vsub.s32 0, %v878
        %v880 = vrot.slane %v865, %v879
        %v881 = vlaneseq
        %v882 = vshrl.u32 %v881, 7
        %v883 = vsub.s32 0, %v882
        %v884 = vrot.slane %v867, %v883
        %v885 = vlaneseq
        %v886 = vshrl.u32 %v885, 7
        %v887 = vsub.s32 0, %v886
        %v888 = vrot.slane %v850, %v887
        %v889 = vlaneseq
        %v890 = vshrl.u32 %v889, 7
        %v891 = vsub.s32 0, %v890
        %v892 = vrot.slane %v864, %v891
        %v893 = vlaneseq
        %v894 = vshrl.u32 %v893, 7
        %v895 = vsub.s32 0, %v894
        %v896 = vrot.slane %v866, %v895
        %v897 = vlaneseq
        %v898 = vshrl.u32 %v897, 7
        %v899 = vsub.s32 0, %v898
        %v900 = vrot.slane %v868, %v899
        %901 = vrot.lane.b32.xlu0 %v872, 64
        %v902 = vpop.permute.xlu0 %901
        %903 = vrot.lane.b32.xlu0 %v876, 64
        %v904 = vpop.permute.xlu0 %903
        %905 = vrot.lane.b32.xlu0 %v880, 64
        %v906 = vpop.permute.xlu0 %905
        %907 = vrot.lane.b32.xlu0 %v884, 64
        %v908 = vpop.permute.xlu0 %907
        %909 = vrot.lane.b32.xlu0 %v888, 64
        %v910 = vpop.permute.xlu0 %909
        %911 = vrot.lane.b32.xlu0 %v892, 64
        %v912 = vpop.permute.xlu0 %911
        %913 = vrot.lane.b32.xlu0 %v896, 64
        %v914 = vpop.permute.xlu0 %913
        %915 = vrot.lane.b32.xlu0 %v900, 64
        %v916 = vpop.permute.xlu0 %915
        %925 = vst.msk [vmem:[%s237 + $0x2] sm:$0x1] %vm482, %v902
        %926 = vst.msk [vmem:[%s237 + $0xa] sm:$0x1] %vm482, %v904
        %927 = vst.msk [vmem:[%s237 + $0x12] sm:$0x1] %vm482, %v906
        %928 = vst.msk [vmem:[%s237 + $0x1a] sm:$0x1] %vm482, %v908
        %929 = vst.msk [vmem:[%s237 + $0x22] sm:$0x1] %vm482, %v910
        %930 = vst.msk [vmem:[%s237 + $0x2a] sm:$0x1] %vm482, %v912
        %931 = vst.msk [vmem:[%s237 + $0x32] sm:$0x1] %vm482, %v914
        %932 = vst.msk [vmem:[%s237 + $0x3a] sm:$0x1] %vm482, %v916
        %s933 = scalar_lea.vmem %s244, 24
        %v934 = vld [vmem:[%s933] sm:$0xff]
        %935 = vrot.lane.b32.xlu0 %v818, 64
        %v936 = vpop.permute.xlu0 %935
        %v937 = vsel %vm267, %v936, 0
        %939 = vmatprep.subr.mxu0 0.0
        %940 = vmatpush1.msra.mxu0 0.0
        %941 = vmatprep.subr.mxu0 0.0
        %942 = vmatpush1.msra.mxu0 0.0
        %943 = vmatprep.subr.mxu0 0.0
        %944 = vmatpush1.msra.mxu0 0.0
        %945 = vmatprep.subr.mxu0 0.0
        %946 = vmatpush1.msra.mxu0 0.0
        %947 = vmatprep.subr.mxu0 0.0
        %948 = vmatpush1.msra.mxu0 0.0
        %949 = vmatprep.subr.mxu0 0.0
        %950 = vmatpush1.msra.mxu0 0.0
        %951 = vmatprep.subr.mxu0 0.0
        %952 = vmatpush1.msra.mxu0 0.0
        %953 = vmatprep.subr.mxu0 0.0
        %954 = vmatpush1.msra.mxu0 0.0
        %955 = vmatprep.subr.mxu0 0.0
        %956 = vmatpush1.msra.mxu0 0.0
        %957 = vmatprep.subr.mxu0 0.0
        %958 = vmatpush1.msra.mxu0 0.0
        %959 = vmatprep.subr.mxu0 0.0
        %960 = vmatpush1.msra.mxu0 0.0
        %961 = vmatprep.subr.mxu0 0.0
        %962 = vmatpush1.msra.mxu0 0.0
        %963 = vmatprep.subr.mxu0 0.0
        %964 = vmatpush1.msra.mxu0 %v257
        %965 = vmatprep.subr.mxu0 0.0
        %966 = vmatpush1.msra.mxu0 %v256
        %967 = vmatprep.subr.mxu0 0.0
        %968 = vmatpush1.msra.mxu0 %v255
        %969 = vmatprep.subr.mxu0 0.0
        %970 = vmatpush1.msra.mxu0 %v254
        %971 = vmatprep.subr.mxu0 0.0
        %972 = vmatpush2.msra.mxu0 0.0
        %973 = vmatprep.subr.mxu0 0.0
        %974 = vmatpush2.msra.mxu0 0.0
        %975 = vmatprep.subr.mxu0 0.0
        %976 = vmatpush2.msra.mxu0 0.0
        %977 = vmatprep.subr.mxu0 0.0
        %978 = vmatpush2.msra.mxu0 0.0
        %979 = vmatprep.subr.mxu0 0.0
        %980 = vmatpush2.msra.mxu0 0.0
        %981 = vmatprep.subr.mxu0 0.0
        %982 = vmatpush2.msra.mxu0 0.0
        %983 = vmatprep.subr.mxu0 0.0
        %984 = vmatpush2.msra.mxu0 0.0
        %985 = vmatprep.subr.mxu0 0.0
        %986 = vmatpush2.msra.mxu0 0.0
        %987 = vmatprep.subr.mxu0 0.0
        %988 = vmatpush2.msra.mxu0 0.0
        %989 = vmatprep.subr.mxu0 0.0
        %990 = vmatpush2.msra.mxu0 0.0
        %991 = vmatprep.subr.mxu0 0.0
        %992 = vmatpush2.msra.mxu0 0.0
        %993 = vmatprep.subr.mxu0 0.0
        %994 = vmatpush2.msra.mxu0 0.0
        %995 = vmatprep.subr.mxu0 0.0
        %996 = vmatpush2.msra.mxu0 0.0
        %997 = vmatprep.subr.mxu0 0.0
        %998 = vmatpush2.msra.mxu0 0.0
        %999 = vmatprep.subr.mxu0 0.0
        %1000 = vmatpush2.msra.mxu0 0.0
        %1001 = vmatprep.subr.mxu0 0.0
        %1002 = vmatpush2.msra.mxu0 0.0
        %1003 = vmatprep.mubr.f32.mxu0 0.0
        %1004 = vmatmul.mubr.f32.gmra.mxu0 %v937
        %v1005 = vpop.f32.mrf.mxu0
        %v1006 = vadd.f32 %v265, %v1005
        %v1007 = vpop.f32.mrf.mxu0
        %1008 = vdwg.mxu0
        %v1009 = vadd.f32 %v934, %v1006
        %v1010 = vadd.f32 %v1009, %v253
        %v1011 = vxor.u32 %v1010, 2147483648
        %v1012 = vmul.f32 %v1011, 1.442695
        %v1013 = vpow.pop %v1012
        %v1014 = vadd.f32 %v1013, 1.0
        %v1015 = vrcp.pop %v1014
        %v1016 = vmul.f32 1.0, %v1015
        %1018 = vrot.lane.b32.xlu0 %v1006, 64
        %v1019 = vpop.permute.xlu0 %1018
        %v1021 = vmul.f32 %v1016, %v1019
        %1023 = vrot.lane.b32.xlu0 %v1021, 64
        %v1024 = vpop.permute.xlu0 %1023
        %v1026 = vadd.f32 %v934, %v1024
        %v1027 = vadd.f32 %v1026, %v253
        %v1028 = vtanh.pop %v1027
        %v1029 = vsub.f32 %v818, %v1028
        %1031 = vrot.lane.b32.xlu0 %v1029, 96
        %v1032 = vpop.permute.xlu0 %1031
        %v1034 = vmul.f32 %v1016, %v1032
        %1036 = vrot.lane.b32.xlu0 %v1034, 32
        %v1037 = vpop.permute.xlu0 %1036
        %v1039 = vadd.f32 %v1028, %v1037
        %v1041 = vcombine.high %v1039, %v1039
        %v1043 = vunpack.c.l.s4 1966171168
        %v1044 = vunpack.c.0.s8 %v1043
        %v1045 = vlaneseq
        %v1046 = vshrl.u32 %v1045, 7
        %v1047 = vsub.s32 %v1044, %v1046
        %v1048 = vrot.slane %v1039, %v1047
        %v1050 = vunpack.c.l.s4 1966171168
        %v1051 = vunpack.c.0.s8 %v1050
        %v1052 = vlaneseq
        %v1053 = vshrl.u32 %v1052, 7
        %v1054 = vsub.s32 %v1051, %v1053
        %v1055 = vrot.slane %v1041, %v1054
        %v1056 = vcombine.high %v1048, %v1048
        %v1057 = vcombine.high %v1055, %v1055
        %v1059 = vunpack.c.l.s4 1966171168
        %v1060 = vunpack.c.0.s8 %v1059
        %v1061 = vlaneseq
        %v1062 = vshrl.u32 %v1061, 7
        %v1063 = vsub.s32 %v1060, %v1062
        %v1064 = vrot.slane %v1048, %v1063
        %v1066 = vunpack.c.l.s4 1966171168
        %v1067 = vunpack.c.0.s8 %v1066
        %v1068 = vlaneseq
        %v1069 = vshrl.u32 %v1068, 7
        %v1070 = vsub.s32 %v1067, %v1069
        %v1071 = vrot.slane %v1055, %v1070
        %v1073 = vunpack.c.l.s4 1966171168
        %v1074 = vunpack.c.0.s8 %v1073
        %v1075 = vlaneseq
        %v1076 = vshrl.u32 %v1075, 7
        %v1077 = vsub.s32 %v1074, %v1076
        %v1078 = vrot.slane %v1056, %v1077
        %v1080 = vunpack.c.l.s4 1966171168
        %v1081 = vunpack.c.0.s8 %v1080
        %v1082 = vlaneseq
        %v1083 = vshrl.u32 %v1082, 7
        %v1084 = vsub.s32 %v1081, %v1083
        %v1085 = vrot.slane %v1057, %v1084
        %v1086 = vcombine.high %v1064, %v1064
        %v1087 = vcombine.high %v1071, %v1071
        %v1088 = vcombine.high %v1078, %v1078
        %v1089 = vcombine.high %v1085, %v1085
        %v1090 = vlaneseq
        %v1091 = vshrl.u32 %v1090, 7
        %v1092 = vsub.s32 0, %v1091
        %v1093 = vrot.slane %v1064, %v1092
        %v1094 = vlaneseq
        %v1095 = vshrl.u32 %v1094, 7
        %v1096 = vsub.s32 0, %v1095
        %v1097 = vrot.slane %v1078, %v1096
        %v1098 = vlaneseq
        %v1099 = vshrl.u32 %v1098, 7
        %v1100 = vsub.s32 0, %v1099
        %v1101 = vrot.slane %v1086, %v1100
        %v1102 = vlaneseq
        %v1103 = vshrl.u32 %v1102, 7
        %v1104 = vsub.s32 0, %v1103
        %v1105 = vrot.slane %v1088, %v1104
        %v1106 = vlaneseq
        %v1107 = vshrl.u32 %v1106, 7
        %v1108 = vsub.s32 0, %v1107
        %v1109 = vrot.slane %v1071, %v1108
        %v1110 = vlaneseq
        %v1111 = vshrl.u32 %v1110, 7
        %v1112 = vsub.s32 0, %v1111
        %v1113 = vrot.slane %v1085, %v1112
        %v1114 = vlaneseq
        %v1115 = vshrl.u32 %v1114, 7
        %v1116 = vsub.s32 0, %v1115
        %v1117 = vrot.slane %v1087, %v1116
        %v1118 = vlaneseq
        %v1119 = vshrl.u32 %v1118, 7
        %v1120 = vsub.s32 0, %v1119
        %v1121 = vrot.slane %v1089, %v1120
        %1122 = vrot.lane.b32.xlu0 %v1093, 64
        %v1123 = vpop.permute.xlu0 %1122
        %1124 = vrot.lane.b32.xlu0 %v1097, 64
        %v1125 = vpop.permute.xlu0 %1124
        %1126 = vrot.lane.b32.xlu0 %v1101, 64
        %v1127 = vpop.permute.xlu0 %1126
        %1128 = vrot.lane.b32.xlu0 %v1105, 64
        %v1129 = vpop.permute.xlu0 %1128
        %1130 = vrot.lane.b32.xlu0 %v1109, 64
        %v1131 = vpop.permute.xlu0 %1130
        %1132 = vrot.lane.b32.xlu0 %v1113, 64
        %v1133 = vpop.permute.xlu0 %1132
        %1134 = vrot.lane.b32.xlu0 %v1117, 64
        %v1135 = vpop.permute.xlu0 %1134
        %1136 = vrot.lane.b32.xlu0 %v1121, 64
        %v1137 = vpop.permute.xlu0 %1136
        %1146 = vst.msk [vmem:[%s237 + $0x3] sm:$0x1] %vm482, %v1123
        %1147 = vst.msk [vmem:[%s237 + $0xb] sm:$0x1] %vm482, %v1125
        %1148 = vst.msk [vmem:[%s237 + $0x13] sm:$0x1] %vm482, %v1127
        %1149 = vst.msk [vmem:[%s237 + $0x1b] sm:$0x1] %vm482, %v1129
        %1150 = vst.msk [vmem:[%s237 + $0x23] sm:$0x1] %vm482, %v1131
        %1151 = vst.msk [vmem:[%s237 + $0x2b] sm:$0x1] %vm482, %v1133
        %1152 = vst.msk [vmem:[%s237 + $0x33] sm:$0x1] %vm482, %v1135
        %1153 = vst.msk [vmem:[%s237 + $0x3b] sm:$0x1] %vm482, %v1137
        %s1154 = scalar_lea.vmem %s244, 32
        %v1155 = vld [vmem:[%s1154] sm:$0xff]
        %1156 = vrot.lane.b32.xlu0 %v1039, 64
        %v1157 = vpop.permute.xlu0 %1156
        %v1158 = vsel %vm267, %v1157, 0
        %1160 = vmatprep.subr.mxu0 0.0
        %1161 = vmatpush1.msra.mxu0 0.0
        %1162 = vmatprep.subr.mxu0 0.0
        %1163 = vmatpush1.msra.mxu0 0.0
        %1164 = vmatprep.subr.mxu0 0.0
        %1165 = vmatpush1.msra.mxu0 0.0
        %1166 = vmatprep.subr.mxu0 0.0
        %1167 = vmatpush1.msra.mxu0 0.0
        %1168 = vmatprep.subr.mxu0 0.0
        %1169 = vmatpush1.msra.mxu0 0.0
        %1170 = vmatprep.subr.mxu0 0.0
        %1171 = vmatpush1.msra.mxu0 0.0
        %1172 = vmatprep.subr.mxu0 0.0
        %1173 = vmatpush1.msra.mxu0 0.0
        %1174 = vmatprep.subr.mxu0 0.0
        %1175 = vmatpush1.msra.mxu0 0.0
        %1176 = vmatprep.subr.mxu0 0.0
        %1177 = vmatpush1.msra.mxu0 0.0
        %1178 = vmatprep.subr.mxu0 0.0
        %1179 = vmatpush1.msra.mxu0 0.0
        %1180 = vmatprep.subr.mxu0 0.0
        %1181 = vmatpush1.msra.mxu0 0.0
        %1182 = vmatprep.subr.mxu0 0.0
        %1183 = vmatpush1.msra.mxu0 0.0
        %1184 = vmatprep.subr.mxu0 0.0
        %1185 = vmatpush1.msra.mxu0 %v257
        %1186 = vmatprep.subr.mxu0 0.0
        %1187 = vmatpush1.msra.mxu0 %v256
        %1188 = vmatprep.subr.mxu0 0.0
        %1189 = vmatpush1.msra.mxu0 %v255
        %1190 = vmatprep.subr.mxu0 0.0
        %1191 = vmatpush1.msra.mxu0 %v254
        %1192 = vmatprep.subr.mxu0 0.0
        %1193 = vmatpush2.msra.mxu0 0.0
        %1194 = vmatprep.subr.mxu0 0.0
        %1195 = vmatpush2.msra.mxu0 0.0
        %1196 = vmatprep.subr.mxu0 0.0
        %1197 = vmatpush2.msra.mxu0 0.0
        %1198 = vmatprep.subr.mxu0 0.0
        %1199 = vmatpush2.msra.mxu0 0.0
        %1200 = vmatprep.subr.mxu0 0.0
        %1201 = vmatpush2.msra.mxu0 0.0
        %1202 = vmatprep.subr.mxu0 0.0
        %1203 = vmatpush2.msra.mxu0 0.0
        %1204 = vmatprep.subr.mxu0 0.0
        %1205 = vmatpush2.msra.mxu0 0.0
        %1206 = vmatprep.subr.mxu0 0.0
        %1207 = vmatpush2.msra.mxu0 0.0
        %1208 = vmatprep.subr.mxu0 0.0
        %1209 = vmatpush2.msra.mxu0 0.0
        %1210 = vmatprep.subr.mxu0 0.0
        %1211 = vmatpush2.msra.mxu0 0.0
        %1212 = vmatprep.subr.mxu0 0.0
        %1213 = vmatpush2.msra.mxu0 0.0
        %1214 = vmatprep.subr.mxu0 0.0
        %1215 = vmatpush2.msra.mxu0 0.0
        %1216 = vmatprep.subr.mxu0 0.0
        %1217 = vmatpush2.msra.mxu0 0.0
        %1218 = vmatprep.subr.mxu0 0.0
        %1219 = vmatpush2.msra.mxu0 0.0
        %1220 = vmatprep.subr.mxu0 0.0
        %1221 = vmatpush2.msra.mxu0 0.0
        %1222 = vmatprep.subr.mxu0 0.0
        %1223 = vmatpush2.msra.mxu0 0.0
        %1224 = vmatprep.mubr.f32.mxu0 0.0
        %1225 = vmatmul.mubr.f32.gmra.mxu0 %v1158
        %v1226 = vpop.f32.mrf.mxu0
        %v1227 = vadd.f32 %v265, %v1226
        %v1228 = vpop.f32.mrf.mxu0
        %1229 = vdwg.mxu0
        %v1230 = vadd.f32 %v1155, %v1227
        %v1231 = vadd.f32 %v1230, %v253
        %v1232 = vxor.u32 %v1231, 2147483648
        %v1233 = vmul.f32 %v1232, 1.442695
        %v1234 = vpow.pop %v1233
        %v1235 = vadd.f32 %v1234, 1.0
        %v1236 = vrcp.pop %v1235
        %v1237 = vmul.f32 1.0, %v1236
        %1239 = vrot.lane.b32.xlu0 %v1227, 64
        %v1240 = vpop.permute.xlu0 %1239
        %v1242 = vmul.f32 %v1237, %v1240
        %1244 = vrot.lane.b32.xlu0 %v1242, 64
        %v1245 = vpop.permute.xlu0 %1244
        %v1247 = vadd.f32 %v1155, %v1245
        %v1248 = vadd.f32 %v1247, %v253
        %v1249 = vtanh.pop %v1248
        %v1250 = vsub.f32 %v1039, %v1249
        %1252 = vrot.lane.b32.xlu0 %v1250, 96
        %v1253 = vpop.permute.xlu0 %1252
        %v1255 = vmul.f32 %v1237, %v1253
        %1257 = vrot.lane.b32.xlu0 %v1255, 32
        %v1258 = vpop.permute.xlu0 %1257
        %v1260 = vadd.f32 %v1249, %v1258
        %v1262 = vcombine.high %v1260, %v1260
        %v1264 = vunpack.c.l.s4 1966171168
        %v1265 = vunpack.c.0.s8 %v1264
        %v1266 = vlaneseq
        %v1267 = vshrl.u32 %v1266, 7
        %v1268 = vsub.s32 %v1265, %v1267
        %v1269 = vrot.slane %v1260, %v1268
        %v1271 = vunpack.c.l.s4 1966171168
        %v1272 = vunpack.c.0.s8 %v1271
        %v1273 = vlaneseq
        %v1274 = vshrl.u32 %v1273, 7
        %v1275 = vsub.s32 %v1272, %v1274
        %v1276 = vrot.slane %v1262, %v1275
        %v1277 = vcombine.high %v1269, %v1269
        %v1278 = vcombine.high %v1276, %v1276
        %v1280 = vunpack.c.l.s4 1966171168
        %v1281 = vunpack.c.0.s8 %v1280
        %v1282 = vlaneseq
        %v1283 = vshrl.u32 %v1282, 7
        %v1284 = vsub.s32 %v1281, %v1283
        %v1285 = vrot.slane %v1269, %v1284
        %v1287 = vunpack.c.l.s4 1966171168
        %v1288 = vunpack.c.0.s8 %v1287
        %v1289 = vlaneseq
        %v1290 = vshrl.u32 %v1289, 7
        %v1291 = vsub.s32 %v1288, %v1290
        %v1292 = vrot.slane %v1276, %v1291
        %v1294 = vunpack.c.l.s4 1966171168
        %v1295 = vunpack.c.0.s8 %v1294
        %v1296 = vlaneseq
        %v1297 = vshrl.u32 %v1296, 7
        %v1298 = vsub.s32 %v1295, %v1297
        %v1299 = vrot.slane %v1277, %v1298
        %v1301 = vunpack.c.l.s4 1966171168
        %v1302 = vunpack.c.0.s8 %v1301
        %v1303 = vlaneseq
        %v1304 = vshrl.u32 %v1303, 7
        %v1305 = vsub.s32 %v1302, %v1304
        %v1306 = vrot.slane %v1278, %v1305
        %v1307 = vcombine.high %v1285, %v1285
        %v1308 = vcombine.high %v1292, %v1292
        %v1309 = vcombine.high %v1299, %v1299
        %v1310 = vcombine.high %v1306, %v1306
        %v1311 = vlaneseq
        %v1312 = vshrl.u32 %v1311, 7
        %v1313 = vsub.s32 0, %v1312
        %v1314 = vrot.slane %v1285, %v1313
        %v1315 = vlaneseq
        %v1316 = vshrl.u32 %v1315, 7
        %v1317 = vsub.s32 0, %v1316
        %v1318 = vrot.slane %v1299, %v1317
        %v1319 = vlaneseq
        %v1320 = vshrl.u32 %v1319, 7
        %v1321 = vsub.s32 0, %v1320
        %v1322 = vrot.slane %v1307, %v1321
        %v1323 = vlaneseq
        %v1324 = vshrl.u32 %v1323, 7
        %v1325 = vsub.s32 0, %v1324
        %v1326 = vrot.slane %v1309, %v1325
        %v1327 = vlaneseq
        %v1328 = vshrl.u32 %v1327, 7
        %v1329 = vsub.s32 0, %v1328
        %v1330 = vrot.slane %v1292, %v1329
        %v1331 = vlaneseq
        %v1332 = vshrl.u32 %v1331, 7
        %v1333 = vsub.s32 0, %v1332
        %v1334 = vrot.slane %v1306, %v1333
        %v1335 = vlaneseq
        %v1336 = vshrl.u32 %v1335, 7
        %v1337 = vsub.s32 0, %v1336
        %v1338 = vrot.slane %v1308, %v1337
        %v1339 = vlaneseq
        %v1340 = vshrl.u32 %v1339, 7
        %v1341 = vsub.s32 0, %v1340
        %v1342 = vrot.slane %v1310, %v1341
        %1343 = vrot.lane.b32.xlu0 %v1314, 64
        %v1344 = vpop.permute.xlu0 %1343
        %1345 = vrot.lane.b32.xlu0 %v1318, 64
        %v1346 = vpop.permute.xlu0 %1345
        %1347 = vrot.lane.b32.xlu0 %v1322, 64
        %v1348 = vpop.permute.xlu0 %1347
        %1349 = vrot.lane.b32.xlu0 %v1326, 64
        %v1350 = vpop.permute.xlu0 %1349
        %1351 = vrot.lane.b32.xlu0 %v1330, 64
        %v1352 = vpop.permute.xlu0 %1351
        %1353 = vrot.lane.b32.xlu0 %v1334, 64
        %v1354 = vpop.permute.xlu0 %1353
        %1355 = vrot.lane.b32.xlu0 %v1338, 64
        %v1356 = vpop.permute.xlu0 %1355
        %1357 = vrot.lane.b32.xlu0 %v1342, 64
        %v1358 = vpop.permute.xlu0 %1357
        %1367 = vst.msk [vmem:[%s237 + $0x4] sm:$0x1] %vm482, %v1344
        %1368 = vst.msk [vmem:[%s237 + $0xc] sm:$0x1] %vm482, %v1346
        %1369 = vst.msk [vmem:[%s237 + $0x14] sm:$0x1] %vm482, %v1348
        %1370 = vst.msk [vmem:[%s237 + $0x1c] sm:$0x1] %vm482, %v1350
        %1371 = vst.msk [vmem:[%s237 + $0x24] sm:$0x1] %vm482, %v1352
        %1372 = vst.msk [vmem:[%s237 + $0x2c] sm:$0x1] %vm482, %v1354
        %1373 = vst.msk [vmem:[%s237 + $0x34] sm:$0x1] %vm482, %v1356
        %1374 = vst.msk [vmem:[%s237 + $0x3c] sm:$0x1] %vm482, %v1358
        %s1375 = scalar_lea.vmem %s244, 40
        %v1376 = vld [vmem:[%s1375] sm:$0xff]
        %1377 = vrot.lane.b32.xlu0 %v1260, 64
        %v1378 = vpop.permute.xlu0 %1377
        %v1379 = vsel %vm267, %v1378, 0
        %1381 = vmatprep.subr.mxu0 0.0
        %1382 = vmatpush1.msra.mxu0 0.0
        %1383 = vmatprep.subr.mxu0 0.0
        %1384 = vmatpush1.msra.mxu0 0.0
        %1385 = vmatprep.subr.mxu0 0.0
        %1386 = vmatpush1.msra.mxu0 0.0
        %1387 = vmatprep.subr.mxu0 0.0
        %1388 = vmatpush1.msra.mxu0 0.0
        %1389 = vmatprep.subr.mxu0 0.0
        %1390 = vmatpush1.msra.mxu0 0.0
        %1391 = vmatprep.subr.mxu0 0.0
        %1392 = vmatpush1.msra.mxu0 0.0
        %1393 = vmatprep.subr.mxu0 0.0
        %1394 = vmatpush1.msra.mxu0 0.0
        %1395 = vmatprep.subr.mxu0 0.0
        %1396 = vmatpush1.msra.mxu0 0.0
        %1397 = vmatprep.subr.mxu0 0.0
        %1398 = vmatpush1.msra.mxu0 0.0
        %1399 = vmatprep.subr.mxu0 0.0
        %1400 = vmatpush1.msra.mxu0 0.0
        %1401 = vmatprep.subr.mxu0 0.0
        %1402 = vmatpush1.msra.mxu0 0.0
        %1403 = vmatprep.subr.mxu0 0.0
        %1404 = vmatpush1.msra.mxu0 0.0
        %1405 = vmatprep.subr.mxu0 0.0
        %1406 = vmatpush1.msra.mxu0 %v257
        %1407 = vmatprep.subr.mxu0 0.0
        %1408 = vmatpush1.msra.mxu0 %v256
        %1409 = vmatprep.subr.mxu0 0.0
        %1410 = vmatpush1.msra.mxu0 %v255
        %1411 = vmatprep.subr.mxu0 0.0
        %1412 = vmatpush1.msra.mxu0 %v254
        %1413 = vmatprep.subr.mxu0 0.0
        %1414 = vmatpush2.msra.mxu0 0.0
        %1415 = vmatprep.subr.mxu0 0.0
        %1416 = vmatpush2.msra.mxu0 0.0
        %1417 = vmatprep.subr.mxu0 0.0
        %1418 = vmatpush2.msra.mxu0 0.0
        %1419 = vmatprep.subr.mxu0 0.0
        %1420 = vmatpush2.msra.mxu0 0.0
        %1421 = vmatprep.subr.mxu0 0.0
        %1422 = vmatpush2.msra.mxu0 0.0
        %1423 = vmatprep.subr.mxu0 0.0
        %1424 = vmatpush2.msra.mxu0 0.0
        %1425 = vmatprep.subr.mxu0 0.0
        %1426 = vmatpush2.msra.mxu0 0.0
        %1427 = vmatprep.subr.mxu0 0.0
        %1428 = vmatpush2.msra.mxu0 0.0
        %1429 = vmatprep.subr.mxu0 0.0
        %1430 = vmatpush2.msra.mxu0 0.0
        %1431 = vmatprep.subr.mxu0 0.0
        %1432 = vmatpush2.msra.mxu0 0.0
        %1433 = vmatprep.subr.mxu0 0.0
        %1434 = vmatpush2.msra.mxu0 0.0
        %1435 = vmatprep.subr.mxu0 0.0
        %1436 = vmatpush2.msra.mxu0 0.0
        %1437 = vmatprep.subr.mxu0 0.0
        %1438 = vmatpush2.msra.mxu0 0.0
        %1439 = vmatprep.subr.mxu0 0.0
        %1440 = vmatpush2.msra.mxu0 0.0
        %1441 = vmatprep.subr.mxu0 0.0
        %1442 = vmatpush2.msra.mxu0 0.0
        %1443 = vmatprep.subr.mxu0 0.0
        %1444 = vmatpush2.msra.mxu0 0.0
        %1445 = vmatprep.mubr.f32.mxu0 0.0
        %1446 = vmatmul.mubr.f32.gmra.mxu0 %v1379
        %v1447 = vpop.f32.mrf.mxu0
        %v1448 = vadd.f32 %v265, %v1447
        %v1449 = vpop.f32.mrf.mxu0
        %1450 = vdwg.mxu0
        %v1451 = vadd.f32 %v1376, %v1448
        %v1452 = vadd.f32 %v1451, %v253
        %v1453 = vxor.u32 %v1452, 2147483648
        %v1454 = vmul.f32 %v1453, 1.442695
        %v1455 = vpow.pop %v1454
        %v1456 = vadd.f32 %v1455, 1.0
        %v1457 = vrcp.pop %v1456
        %v1458 = vmul.f32 1.0, %v1457
        %1460 = vrot.lane.b32.xlu0 %v1448, 64
        %v1461 = vpop.permute.xlu0 %1460
        %v1463 = vmul.f32 %v1458, %v1461
        %1465 = vrot.lane.b32.xlu0 %v1463, 64
        %v1466 = vpop.permute.xlu0 %1465
        %v1468 = vadd.f32 %v1376, %v1466
        %v1469 = vadd.f32 %v1468, %v253
        %v1470 = vtanh.pop %v1469
        %v1471 = vsub.f32 %v1260, %v1470
        %1473 = vrot.lane.b32.xlu0 %v1471, 96
        %v1474 = vpop.permute.xlu0 %1473
        %v1476 = vmul.f32 %v1458, %v1474
        %1478 = vrot.lane.b32.xlu0 %v1476, 32
        %v1479 = vpop.permute.xlu0 %1478
        %v1481 = vadd.f32 %v1470, %v1479
        %v1483 = vcombine.high %v1481, %v1481
        %v1485 = vunpack.c.l.s4 1966171168
        %v1486 = vunpack.c.0.s8 %v1485
        %v1487 = vlaneseq
        %v1488 = vshrl.u32 %v1487, 7
        %v1489 = vsub.s32 %v1486, %v1488
        %v1490 = vrot.slane %v1481, %v1489
        %v1492 = vunpack.c.l.s4 1966171168
        %v1493 = vunpack.c.0.s8 %v1492
        %v1494 = vlaneseq
        %v1495 = vshrl.u32 %v1494, 7
        %v1496 = vsub.s32 %v1493, %v1495
        %v1497 = vrot.slane %v1483, %v1496
        %v1498 = vcombine.high %v1490, %v1490
        %v1499 = vcombine.high %v1497, %v1497
        %v1501 = vunpack.c.l.s4 1966171168
        %v1502 = vunpack.c.0.s8 %v1501
        %v1503 = vlaneseq
        %v1504 = vshrl.u32 %v1503, 7
        %v1505 = vsub.s32 %v1502, %v1504
        %v1506 = vrot.slane %v1490, %v1505
        %v1508 = vunpack.c.l.s4 1966171168
        %v1509 = vunpack.c.0.s8 %v1508
        %v1510 = vlaneseq
        %v1511 = vshrl.u32 %v1510, 7
        %v1512 = vsub.s32 %v1509, %v1511
        %v1513 = vrot.slane %v1497, %v1512
        %v1515 = vunpack.c.l.s4 1966171168
        %v1516 = vunpack.c.0.s8 %v1515
        %v1517 = vlaneseq
        %v1518 = vshrl.u32 %v1517, 7
        %v1519 = vsub.s32 %v1516, %v1518
        %v1520 = vrot.slane %v1498, %v1519
        %v1522 = vunpack.c.l.s4 1966171168
        %v1523 = vunpack.c.0.s8 %v1522
        %v1524 = vlaneseq
        %v1525 = vshrl.u32 %v1524, 7
        %v1526 = vsub.s32 %v1523, %v1525
        %v1527 = vrot.slane %v1499, %v1526
        %v1528 = vcombine.high %v1506, %v1506
        %v1529 = vcombine.high %v1513, %v1513
        %v1530 = vcombine.high %v1520, %v1520
        %v1531 = vcombine.high %v1527, %v1527
        %v1532 = vlaneseq
        %v1533 = vshrl.u32 %v1532, 7
        %v1534 = vsub.s32 0, %v1533
        %v1535 = vrot.slane %v1506, %v1534
        %v1536 = vlaneseq
        %v1537 = vshrl.u32 %v1536, 7
        %v1538 = vsub.s32 0, %v1537
        %v1539 = vrot.slane %v1520, %v1538
        %v1540 = vlaneseq
        %v1541 = vshrl.u32 %v1540, 7
        %v1542 = vsub.s32 0, %v1541
        %v1543 = vrot.slane %v1528, %v1542
        %v1544 = vlaneseq
        %v1545 = vshrl.u32 %v1544, 7
        %v1546 = vsub.s32 0, %v1545
        %v1547 = vrot.slane %v1530, %v1546
        %v1548 = vlaneseq
        %v1549 = vshrl.u32 %v1548, 7
        %v1550 = vsub.s32 0, %v1549
        %v1551 = vrot.slane %v1513, %v1550
        %v1552 = vlaneseq
        %v1553 = vshrl.u32 %v1552, 7
        %v1554 = vsub.s32 0, %v1553
        %v1555 = vrot.slane %v1527, %v1554
        %v1556 = vlaneseq
        %v1557 = vshrl.u32 %v1556, 7
        %v1558 = vsub.s32 0, %v1557
        %v1559 = vrot.slane %v1529, %v1558
        %v1560 = vlaneseq
        %v1561 = vshrl.u32 %v1560, 7
        %v1562 = vsub.s32 0, %v1561
        %v1563 = vrot.slane %v1531, %v1562
        %1564 = vrot.lane.b32.xlu0 %v1535, 64
        %v1565 = vpop.permute.xlu0 %1564
        %1566 = vrot.lane.b32.xlu0 %v1539, 64
        %v1567 = vpop.permute.xlu0 %1566
        %1568 = vrot.lane.b32.xlu0 %v1543, 64
        %v1569 = vpop.permute.xlu0 %1568
        %1570 = vrot.lane.b32.xlu0 %v1547, 64
        %v1571 = vpop.permute.xlu0 %1570
        %1572 = vrot.lane.b32.xlu0 %v1551, 64
        %v1573 = vpop.permute.xlu0 %1572
        %1574 = vrot.lane.b32.xlu0 %v1555, 64
        %v1575 = vpop.permute.xlu0 %1574
        %1576 = vrot.lane.b32.xlu0 %v1559, 64
        %v1577 = vpop.permute.xlu0 %1576
        %1578 = vrot.lane.b32.xlu0 %v1563, 64
        %v1579 = vpop.permute.xlu0 %1578
        %1588 = vst.msk [vmem:[%s237 + $0x5] sm:$0x1] %vm482, %v1565
        %1589 = vst.msk [vmem:[%s237 + $0xd] sm:$0x1] %vm482, %v1567
        %1590 = vst.msk [vmem:[%s237 + $0x15] sm:$0x1] %vm482, %v1569
        %1591 = vst.msk [vmem:[%s237 + $0x1d] sm:$0x1] %vm482, %v1571
        %1592 = vst.msk [vmem:[%s237 + $0x25] sm:$0x1] %vm482, %v1573
        %1593 = vst.msk [vmem:[%s237 + $0x2d] sm:$0x1] %vm482, %v1575
        %1594 = vst.msk [vmem:[%s237 + $0x35] sm:$0x1] %vm482, %v1577
        %1595 = vst.msk [vmem:[%s237 + $0x3d] sm:$0x1] %vm482, %v1579
        %s1596 = scalar_lea.vmem %s244, 48
        %v1597 = vld [vmem:[%s1596] sm:$0xff]
        %1598 = vrot.lane.b32.xlu0 %v1481, 64
        %v1599 = vpop.permute.xlu0 %1598
        %v1600 = vsel %vm267, %v1599, 0
        %1602 = vmatprep.subr.mxu0 0.0
        %1603 = vmatpush1.msra.mxu0 0.0
        %1604 = vmatprep.subr.mxu0 0.0
        %1605 = vmatpush1.msra.mxu0 0.0
        %1606 = vmatprep.subr.mxu0 0.0
        %1607 = vmatpush1.msra.mxu0 0.0
        %1608 = vmatprep.subr.mxu0 0.0
        %1609 = vmatpush1.msra.mxu0 0.0
        %1610 = vmatprep.subr.mxu0 0.0
        %1611 = vmatpush1.msra.mxu0 0.0
        %1612 = vmatprep.subr.mxu0 0.0
        %1613 = vmatpush1.msra.mxu0 0.0
        %1614 = vmatprep.subr.mxu0 0.0
        %1615 = vmatpush1.msra.mxu0 0.0
        %1616 = vmatprep.subr.mxu0 0.0
        %1617 = vmatpush1.msra.mxu0 0.0
        %1618 = vmatprep.subr.mxu0 0.0
        %1619 = vmatpush1.msra.mxu0 0.0
        %1620 = vmatprep.subr.mxu0 0.0
        %1621 = vmatpush1.msra.mxu0 0.0
        %1622 = vmatprep.subr.mxu0 0.0
        %1623 = vmatpush1.msra.mxu0 0.0
        %1624 = vmatprep.subr.mxu0 0.0
        %1625 = vmatpush1.msra.mxu0 0.0
        %1626 = vmatprep.subr.mxu0 0.0
        %1627 = vmatpush1.msra.mxu0 %v257
        %1628 = vmatprep.subr.mxu0 0.0
        %1629 = vmatpush1.msra.mxu0 %v256
        %1630 = vmatprep.subr.mxu0 0.0
        %1631 = vmatpush1.msra.mxu0 %v255
        %1632 = vmatprep.subr.mxu0 0.0
        %1633 = vmatpush1.msra.mxu0 %v254
        %1634 = vmatprep.subr.mxu0 0.0
        %1635 = vmatpush2.msra.mxu0 0.0
        %1636 = vmatprep.subr.mxu0 0.0
        %1637 = vmatpush2.msra.mxu0 0.0
        %1638 = vmatprep.subr.mxu0 0.0
        %1639 = vmatpush2.msra.mxu0 0.0
        %1640 = vmatprep.subr.mxu0 0.0
        %1641 = vmatpush2.msra.mxu0 0.0
        %1642 = vmatprep.subr.mxu0 0.0
        %1643 = vmatpush2.msra.mxu0 0.0
        %1644 = vmatprep.subr.mxu0 0.0
        %1645 = vmatpush2.msra.mxu0 0.0
        %1646 = vmatprep.subr.mxu0 0.0
        %1647 = vmatpush2.msra.mxu0 0.0
        %1648 = vmatprep.subr.mxu0 0.0
        %1649 = vmatpush2.msra.mxu0 0.0
        %1650 = vmatprep.subr.mxu0 0.0
        %1651 = vmatpush2.msra.mxu0 0.0
        %1652 = vmatprep.subr.mxu0 0.0
        %1653 = vmatpush2.msra.mxu0 0.0
        %1654 = vmatprep.subr.mxu0 0.0
        %1655 = vmatpush2.msra.mxu0 0.0
        %1656 = vmatprep.subr.mxu0 0.0
        %1657 = vmatpush2.msra.mxu0 0.0
        %1658 = vmatprep.subr.mxu0 0.0
        %1659 = vmatpush2.msra.mxu0 0.0
        %1660 = vmatprep.subr.mxu0 0.0
        %1661 = vmatpush2.msra.mxu0 0.0
        %1662 = vmatprep.subr.mxu0 0.0
        %1663 = vmatpush2.msra.mxu0 0.0
        %1664 = vmatprep.subr.mxu0 0.0
        %1665 = vmatpush2.msra.mxu0 0.0
        %1666 = vmatprep.mubr.f32.mxu0 0.0
        %1667 = vmatmul.mubr.f32.gmra.mxu0 %v1600
        %v1668 = vpop.f32.mrf.mxu0
        %v1669 = vadd.f32 %v265, %v1668
        %v1670 = vpop.f32.mrf.mxu0
        %1671 = vdwg.mxu0
        %v1672 = vadd.f32 %v1597, %v1669
        %v1673 = vadd.f32 %v1672, %v253
        %v1674 = vxor.u32 %v1673, 2147483648
        %v1675 = vmul.f32 %v1674, 1.442695
        %v1676 = vpow.pop %v1675
        %v1677 = vadd.f32 %v1676, 1.0
        %v1678 = vrcp.pop %v1677
        %v1679 = vmul.f32 1.0, %v1678
        %1681 = vrot.lane.b32.xlu0 %v1669, 64
        %v1682 = vpop.permute.xlu0 %1681
        %v1684 = vmul.f32 %v1679, %v1682
        %1686 = vrot.lane.b32.xlu0 %v1684, 64
        %v1687 = vpop.permute.xlu0 %1686
        %v1689 = vadd.f32 %v1597, %v1687
        %v1690 = vadd.f32 %v1689, %v253
        %v1691 = vtanh.pop %v1690
        %v1692 = vsub.f32 %v1481, %v1691
        %1694 = vrot.lane.b32.xlu0 %v1692, 96
        %v1695 = vpop.permute.xlu0 %1694
        %v1697 = vmul.f32 %v1679, %v1695
        %1699 = vrot.lane.b32.xlu0 %v1697, 32
        %v1700 = vpop.permute.xlu0 %1699
        %v1702 = vadd.f32 %v1691, %v1700
        %v1704 = vcombine.high %v1702, %v1702
        %v1706 = vunpack.c.l.s4 1966171168
        %v1707 = vunpack.c.0.s8 %v1706
        %v1708 = vlaneseq
        %v1709 = vshrl.u32 %v1708, 7
        %v1710 = vsub.s32 %v1707, %v1709
        %v1711 = vrot.slane %v1702, %v1710
        %v1713 = vunpack.c.l.s4 1966171168
        %v1714 = vunpack.c.0.s8 %v1713
        %v1715 = vlaneseq
        %v1716 = vshrl.u32 %v1715, 7
        %v1717 = vsub.s32 %v1714, %v1716
        %v1718 = vrot.slane %v1704, %v1717
        %v1719 = vcombine.high %v1711, %v1711
        %v1720 = vcombine.high %v1718, %v1718
        %v1722 = vunpack.c.l.s4 1966171168
        %v1723 = vunpack.c.0.s8 %v1722
        %v1724 = vlaneseq
        %v1725 = vshrl.u32 %v1724, 7
        %v1726 = vsub.s32 %v1723, %v1725
        %v1727 = vrot.slane %v1711, %v1726
        %v1729 = vunpack.c.l.s4 1966171168
        %v1730 = vunpack.c.0.s8 %v1729
        %v1731 = vlaneseq
        %v1732 = vshrl.u32 %v1731, 7
        %v1733 = vsub.s32 %v1730, %v1732
        %v1734 = vrot.slane %v1718, %v1733
        %v1736 = vunpack.c.l.s4 1966171168
        %v1737 = vunpack.c.0.s8 %v1736
        %v1738 = vlaneseq
        %v1739 = vshrl.u32 %v1738, 7
        %v1740 = vsub.s32 %v1737, %v1739
        %v1741 = vrot.slane %v1719, %v1740
        %v1743 = vunpack.c.l.s4 1966171168
        %v1744 = vunpack.c.0.s8 %v1743
        %v1745 = vlaneseq
        %v1746 = vshrl.u32 %v1745, 7
        %v1747 = vsub.s32 %v1744, %v1746
        %v1748 = vrot.slane %v1720, %v1747
        %v1749 = vcombine.high %v1727, %v1727
        %v1750 = vcombine.high %v1734, %v1734
        %v1751 = vcombine.high %v1741, %v1741
        %v1752 = vcombine.high %v1748, %v1748
        %v1753 = vlaneseq
        %v1754 = vshrl.u32 %v1753, 7
        %v1755 = vsub.s32 0, %v1754
        %v1756 = vrot.slane %v1727, %v1755
        %v1757 = vlaneseq
        %v1758 = vshrl.u32 %v1757, 7
        %v1759 = vsub.s32 0, %v1758
        %v1760 = vrot.slane %v1741, %v1759
        %v1761 = vlaneseq
        %v1762 = vshrl.u32 %v1761, 7
        %v1763 = vsub.s32 0, %v1762
        %v1764 = vrot.slane %v1749, %v1763
        %v1765 = vlaneseq
        %v1766 = vshrl.u32 %v1765, 7
        %v1767 = vsub.s32 0, %v1766
        %v1768 = vrot.slane %v1751, %v1767
        %v1769 = vlaneseq
        %v1770 = vshrl.u32 %v1769, 7
        %v1771 = vsub.s32 0, %v1770
        %v1772 = vrot.slane %v1734, %v1771
        %v1773 = vlaneseq
        %v1774 = vshrl.u32 %v1773, 7
        %v1775 = vsub.s32 0, %v1774
        %v1776 = vrot.slane %v1748, %v1775
        %v1777 = vlaneseq
        %v1778 = vshrl.u32 %v1777, 7
        %v1779 = vsub.s32 0, %v1778
        %v1780 = vrot.slane %v1750, %v1779
        %v1781 = vlaneseq
        %v1782 = vshrl.u32 %v1781, 7
        %v1783 = vsub.s32 0, %v1782
        %v1784 = vrot.slane %v1752, %v1783
        %1785 = vrot.lane.b32.xlu0 %v1756, 64
        %v1786 = vpop.permute.xlu0 %1785
        %1787 = vrot.lane.b32.xlu0 %v1760, 64
        %v1788 = vpop.permute.xlu0 %1787
        %1789 = vrot.lane.b32.xlu0 %v1764, 64
        %v1790 = vpop.permute.xlu0 %1789
        %1791 = vrot.lane.b32.xlu0 %v1768, 64
        %v1792 = vpop.permute.xlu0 %1791
        %1793 = vrot.lane.b32.xlu0 %v1772, 64
        %v1794 = vpop.permute.xlu0 %1793
        %1795 = vrot.lane.b32.xlu0 %v1776, 64
        %v1796 = vpop.permute.xlu0 %1795
        %1797 = vrot.lane.b32.xlu0 %v1780, 64
        %v1798 = vpop.permute.xlu0 %1797
        %1799 = vrot.lane.b32.xlu0 %v1784, 64
        %v1800 = vpop.permute.xlu0 %1799
        %1809 = vst.msk [vmem:[%s237 + $0x6] sm:$0x1] %vm482, %v1786
        %1810 = vst.msk [vmem:[%s237 + $0xe] sm:$0x1] %vm482, %v1788
        %1811 = vst.msk [vmem:[%s237 + $0x16] sm:$0x1] %vm482, %v1790
        %1812 = vst.msk [vmem:[%s237 + $0x1e] sm:$0x1] %vm482, %v1792
        %1813 = vst.msk [vmem:[%s237 + $0x26] sm:$0x1] %vm482, %v1794
        %1814 = vst.msk [vmem:[%s237 + $0x2e] sm:$0x1] %vm482, %v1796
        %1815 = vst.msk [vmem:[%s237 + $0x36] sm:$0x1] %vm482, %v1798
        %1816 = vst.msk [vmem:[%s237 + $0x3e] sm:$0x1] %vm482, %v1800
        %s1817 = scalar_lea.vmem %s244, 56
        %v1818 = vld [vmem:[%s1817] sm:$0xff]
        %1819 = vrot.lane.b32.xlu0 %v1702, 64
        %v1820 = vpop.permute.xlu0 %1819
        %v1821 = vsel %vm267, %v1820, 0
        %1823 = vmatprep.subr.mxu0 0.0
        %1824 = vmatpush1.msra.mxu0 0.0
        %1825 = vmatprep.subr.mxu0 0.0
        %1826 = vmatpush1.msra.mxu0 0.0
        %1827 = vmatprep.subr.mxu0 0.0
        %1828 = vmatpush1.msra.mxu0 0.0
        %1829 = vmatprep.subr.mxu0 0.0
        %1830 = vmatpush1.msra.mxu0 0.0
        %1831 = vmatprep.subr.mxu0 0.0
        %1832 = vmatpush1.msra.mxu0 0.0
        %1833 = vmatprep.subr.mxu0 0.0
        %1834 = vmatpush1.msra.mxu0 0.0
        %1835 = vmatprep.subr.mxu0 0.0
        %1836 = vmatpush1.msra.mxu0 0.0
        %1837 = vmatprep.subr.mxu0 0.0
        %1838 = vmatpush1.msra.mxu0 0.0
        %1839 = vmatprep.subr.mxu0 0.0
        %1840 = vmatpush1.msra.mxu0 0.0
        %1841 = vmatprep.subr.mxu0 0.0
        %1842 = vmatpush1.msra.mxu0 0.0
        %1843 = vmatprep.subr.mxu0 0.0
        %1844 = vmatpush1.msra.mxu0 0.0
        %1845 = vmatprep.subr.mxu0 0.0
        %1846 = vmatpush1.msra.mxu0 0.0
        %1847 = vmatprep.subr.mxu0 0.0
        %1848 = vmatpush1.msra.mxu0 %v257
        %1849 = vmatprep.subr.mxu0 0.0
        %1850 = vmatpush1.msra.mxu0 %v256
        %1851 = vmatprep.subr.mxu0 0.0
        %1852 = vmatpush1.msra.mxu0 %v255
        %1853 = vmatprep.subr.mxu0 0.0
        %1854 = vmatpush1.msra.mxu0 %v254
        %1855 = vmatprep.subr.mxu0 0.0
        %1856 = vmatpush2.msra.mxu0 0.0
        %1857 = vmatprep.subr.mxu0 0.0
        %1858 = vmatpush2.msra.mxu0 0.0
        %1859 = vmatprep.subr.mxu0 0.0
        %1860 = vmatpush2.msra.mxu0 0.0
        %1861 = vmatprep.subr.mxu0 0.0
        %1862 = vmatpush2.msra.mxu0 0.0
        %1863 = vmatprep.subr.mxu0 0.0
        %1864 = vmatpush2.msra.mxu0 0.0
        %1865 = vmatprep.subr.mxu0 0.0
        %1866 = vmatpush2.msra.mxu0 0.0
        %1867 = vmatprep.subr.mxu0 0.0
        %1868 = vmatpush2.msra.mxu0 0.0
        %1869 = vmatprep.subr.mxu0 0.0
        %1870 = vmatpush2.msra.mxu0 0.0
        %1871 = vmatprep.subr.mxu0 0.0
        %1872 = vmatpush2.msra.mxu0 0.0
        %1873 = vmatprep.subr.mxu0 0.0
        %1874 = vmatpush2.msra.mxu0 0.0
        %1875 = vmatprep.subr.mxu0 0.0
        %1876 = vmatpush2.msra.mxu0 0.0
        %1877 = vmatprep.subr.mxu0 0.0
        %1878 = vmatpush2.msra.mxu0 0.0
        %1879 = vmatprep.subr.mxu0 0.0
        %1880 = vmatpush2.msra.mxu0 0.0
        %1881 = vmatprep.subr.mxu0 0.0
        %1882 = vmatpush2.msra.mxu0 0.0
        %1883 = vmatprep.subr.mxu0 0.0
        %1884 = vmatpush2.msra.mxu0 0.0
        %1885 = vmatprep.subr.mxu0 0.0
        %1886 = vmatpush2.msra.mxu0 0.0
        %1887 = vmatprep.mubr.f32.mxu0 0.0
        %1888 = vmatmul.mubr.f32.gmra.mxu0 %v1821
        %v1889 = vpop.f32.mrf.mxu0
        %v1890 = vadd.f32 %v265, %v1889
        %v1891 = vpop.f32.mrf.mxu0
        %1892 = vdwg.mxu0
        %v1893 = vadd.f32 %v1818, %v1890
        %v1894 = vadd.f32 %v1893, %v253
        %v1895 = vxor.u32 %v1894, 2147483648
        %v1896 = vmul.f32 %v1895, 1.442695
        %v1897 = vpow.pop %v1896
        %v1898 = vadd.f32 %v1897, 1.0
        %v1899 = vrcp.pop %v1898
        %v1900 = vmul.f32 1.0, %v1899
        %1902 = vrot.lane.b32.xlu0 %v1890, 64
        %v1903 = vpop.permute.xlu0 %1902
        %v1905 = vmul.f32 %v1900, %v1903
        %1907 = vrot.lane.b32.xlu0 %v1905, 64
        %v1908 = vpop.permute.xlu0 %1907
        %v1910 = vadd.f32 %v1818, %v1908
        %v1911 = vadd.f32 %v1910, %v253
        %v1912 = vtanh.pop %v1911
        %v1913 = vsub.f32 %v1702, %v1912
        %1915 = vrot.lane.b32.xlu0 %v1913, 96
        %v1916 = vpop.permute.xlu0 %1915
        %v1918 = vmul.f32 %v1900, %v1916
        %1920 = vrot.lane.b32.xlu0 %v1918, 32
        %v1921 = vpop.permute.xlu0 %1920
        %v1923 = vadd.f32 %v1912, %v1921
        %v1925 = vcombine.high %v1923, %v1923
        %v1927 = vunpack.c.l.s4 1966171168
        %v1928 = vunpack.c.0.s8 %v1927
        %v1929 = vlaneseq
        %v1930 = vshrl.u32 %v1929, 7
        %v1931 = vsub.s32 %v1928, %v1930
        %v1932 = vrot.slane %v1923, %v1931
        %v1934 = vunpack.c.l.s4 1966171168
        %v1935 = vunpack.c.0.s8 %v1934
        %v1936 = vlaneseq
        %v1937 = vshrl.u32 %v1936, 7
        %v1938 = vsub.s32 %v1935, %v1937
        %v1939 = vrot.slane %v1925, %v1938
        %v1940 = vcombine.high %v1932, %v1932
        %v1941 = vcombine.high %v1939, %v1939
        %v1943 = vunpack.c.l.s4 1966171168
        %v1944 = vunpack.c.0.s8 %v1943
        %v1945 = vlaneseq
        %v1946 = vshrl.u32 %v1945, 7
        %v1947 = vsub.s32 %v1944, %v1946
        %v1948 = vrot.slane %v1932, %v1947
        %v1950 = vunpack.c.l.s4 1966171168
        %v1951 = vunpack.c.0.s8 %v1950
        %v1952 = vlaneseq
        %v1953 = vshrl.u32 %v1952, 7
        %v1954 = vsub.s32 %v1951, %v1953
        %v1955 = vrot.slane %v1939, %v1954
        %v1957 = vunpack.c.l.s4 1966171168
        %v1958 = vunpack.c.0.s8 %v1957
        %v1959 = vlaneseq
        %v1960 = vshrl.u32 %v1959, 7
        %v1961 = vsub.s32 %v1958, %v1960
        %v1962 = vrot.slane %v1940, %v1961
        %v1964 = vunpack.c.l.s4 1966171168
        %v1965 = vunpack.c.0.s8 %v1964
        %v1966 = vlaneseq
        %v1967 = vshrl.u32 %v1966, 7
        %v1968 = vsub.s32 %v1965, %v1967
        %v1969 = vrot.slane %v1941, %v1968
        %v1970 = vcombine.high %v1948, %v1948
        %v1971 = vcombine.high %v1955, %v1955
        %v1972 = vcombine.high %v1962, %v1962
        %v1973 = vcombine.high %v1969, %v1969
        %v1974 = vlaneseq
        %v1975 = vshrl.u32 %v1974, 7
        %v1976 = vsub.s32 0, %v1975
        %v1977 = vrot.slane %v1948, %v1976
        %v1978 = vlaneseq
        %v1979 = vshrl.u32 %v1978, 7
        %v1980 = vsub.s32 0, %v1979
        %v1981 = vrot.slane %v1962, %v1980
        %v1982 = vlaneseq
        %v1983 = vshrl.u32 %v1982, 7
        %v1984 = vsub.s32 0, %v1983
        %v1985 = vrot.slane %v1970, %v1984
        %v1986 = vlaneseq
        %v1987 = vshrl.u32 %v1986, 7
        %v1988 = vsub.s32 0, %v1987
        %v1989 = vrot.slane %v1972, %v1988
        %v1990 = vlaneseq
        %v1991 = vshrl.u32 %v1990, 7
        %v1992 = vsub.s32 0, %v1991
        %v1993 = vrot.slane %v1955, %v1992
        %v1994 = vlaneseq
        %v1995 = vshrl.u32 %v1994, 7
        %v1996 = vsub.s32 0, %v1995
        %v1997 = vrot.slane %v1969, %v1996
        %v1998 = vlaneseq
        %v1999 = vshrl.u32 %v1998, 7
        %v2000 = vsub.s32 0, %v1999
        %v2001 = vrot.slane %v1971, %v2000
        %v2002 = vlaneseq
        %v2003 = vshrl.u32 %v2002, 7
        %v2004 = vsub.s32 0, %v2003
        %v2005 = vrot.slane %v1973, %v2004
        %2006 = vrot.lane.b32.xlu0 %v1977, 64
        %v2007 = vpop.permute.xlu0 %2006
        %2008 = vrot.lane.b32.xlu0 %v1981, 64
        %v2009 = vpop.permute.xlu0 %2008
        %2010 = vrot.lane.b32.xlu0 %v1985, 64
        %v2011 = vpop.permute.xlu0 %2010
        %2012 = vrot.lane.b32.xlu0 %v1989, 64
        %v2013 = vpop.permute.xlu0 %2012
        %2014 = vrot.lane.b32.xlu0 %v1993, 64
        %v2015 = vpop.permute.xlu0 %2014
        %2016 = vrot.lane.b32.xlu0 %v1997, 64
        %v2017 = vpop.permute.xlu0 %2016
        %2018 = vrot.lane.b32.xlu0 %v2001, 64
        %v2019 = vpop.permute.xlu0 %2018
        %2020 = vrot.lane.b32.xlu0 %v2005, 64
        %v2021 = vpop.permute.xlu0 %2020
        %2030 = vst.msk [vmem:[%s237 + $0x7] sm:$0x1] %vm482, %v2007
        %2031 = vst.msk [vmem:[%s237 + $0xf] sm:$0x1] %vm482, %v2009
        %2032 = vst.msk [vmem:[%s237 + $0x17] sm:$0x1] %vm482, %v2011
        %2033 = vst.msk [vmem:[%s237 + $0x1f] sm:$0x1] %vm482, %v2013
        %2034 = vst.msk [vmem:[%s237 + $0x27] sm:$0x1] %vm482, %v2015
        %2035 = vst.msk [vmem:[%s237 + $0x2f] sm:$0x1] %vm482, %v2017
        %2036 = vst.msk [vmem:[%s237 + $0x37] sm:$0x1] %vm482, %v2019
        %2037 = vst.msk [vmem:[%s237 + $0x3f] sm:$0x1] %vm482, %v2021
        %2038 = vrot.lane.b32.xlu0 %v1923, 64
        %v2039 = vpop.permute.xlu0 %2038
        %2041 = vst.msk [vmem:[#allocation2] sm:$0xff] %vm267, %v2039
        %p2042 = scmp.eq.s32.totalorder %s18, 1
        // Predicated region
        $region45: #{conditional_gru.1} parent=39 // pred_check
          %p2043 = pneg %p2042
        $region46: #{conditional_gru.1} parent=39 // pred_check_branch
          %2045 = sbr.rel (%p2043) target = $region48
        $region47: #{conditional_gru.1} parent=39 // pred_region
          %2046 = vst.msk [vmem:[%s6] sm:$0xff] %vm267, %v2039
        $region48: #{conditional_gru.1} parent=39 // pred_fallthru
          _
        %s2047 = sand.u32 %s136, 1
        %s2048 = sand.u32 %s136, 1
        %s2049 = smul.addr %s2048, 64
        %s2050 = scalar_lea.vmem [#allocation3], %s2049
        // Predicated region
        $region49: #{conditional_gru.1} parent=39 // pred_check
          %p2051 = pneg %p146
        $region50: #{conditional_gru.1} parent=39 // pred_check_branch
          %2053 = sbr.rel (%p2051) target = $region52
        $region51: #{conditional_gru.1} parent=39 // pred_region
          %s2054 = smul.addr %s18, 8
          %s2055 = scalar_lea.vmem %s5, %s2054
          // Predicated region
          $region53: #{conditional_gru.1} parent=51 // pred_check
            _
          $region54: #{conditional_gru.1} parent=51 // pred_check_branch
            %2057 = sbr.rel (0) target = $region56
          $region55: #{conditional_gru.1} parent=51 // pred_region
            // Predicated region
            $region57: #{conditional_gru.1} parent=55 // pred_check
              _
            $region58: #{conditional_gru.1} parent=55 // pred_check_branch
              %2059 = sbr.rel (0) target = $region60
            $region59: #{conditional_gru.1} parent=55 // pred_region
              // Predicated region
              $region72: #{conditional_gru.1} parent=59 // pred_check
                _
              $region73: #{conditional_gru.1} parent=59 // pred_check_branch
                %2089 = sbr.rel (0) target = $region75
              $region74: #{conditional_gru.1} parent=59 // pred_region
                loop: start=0, step=1, limit=1
                $region76: #{conditional_gru.1} parent=74 // loop_pre_header
                  _
                $region77: #{conditional_gru.1} parent=74 // loop_header
                  %s2091 = sphi 0, %s2095
                  %p2092 = scmp.ge.s32.totalorder %s2091, 1
                  %s2096 = sphi %s2050, %s2050
                  %s2097 = sphi %s2055, %s2055
                $region78: #{conditional_gru.1} parent=74 // loop_header_branch
                  %2094 = sbr.rel (%p2092) target = $region82
                $region79: #{conditional_gru.1} parent=74 // loop_body
                  %v2098 = vld [vmem:[%s2096] sm:$0xff]
                  %2099 = vst [vmem:[%s2097] sm:$0xff] %v2098
                  %v2100 = vld [vmem:[%s2096 + $0x8] sm:$0xff]
                  %2101 = vst [vmem:[%s2097 + $0x10] sm:$0xff] %v2100
                  %v2102 = vld [vmem:[%s2096 + $0x10] sm:$0xff]
                  %2103 = vst [vmem:[%s2097 + $0x20] sm:$0xff] %v2102
                  %v2104 = vld [vmem:[%s2096 + $0x18] sm:$0xff]
                  %2105 = vst [vmem:[%s2097 + $0x30] sm:$0xff] %v2104
                  %v2106 = vld [vmem:[%s2096 + $0x20] sm:$0xff]
                  %2107 = vst [vmem:[%s2097 + $0x40] sm:$0xff] %v2106
                  %v2108 = vld [vmem:[%s2096 + $0x28] sm:$0xff]
                  %2109 = vst [vmem:[%s2097 + $0x50] sm:$0xff] %v2108
                  %v2110 = vld [vmem:[%s2096 + $0x30] sm:$0xff]
                  %2111 = vst [vmem:[%s2097 + $0x60] sm:$0xff] %v2110
                  %v2112 = vld [vmem:[%s2096 + $0x38] sm:$0xff]
                  %2113 = vst [vmem:[%s2097 + $0x70] sm:$0xff] %v2112
                $region80: #{conditional_gru.1} parent=74 // loop_footer
                  %s2095 = sadd.s32 1, %s2091
                $region81: #{conditional_gru.1} parent=74 // loop_footer_branch
                  %2090 = sbr.rel target = $region77
                $region82: #{conditional_gru.1} parent=74 // loop_exit
                  _
              $region75: #{conditional_gru.1} parent=59 // pred_fallthru
                _
              // Predicated region
              $region83: #{conditional_gru.1} parent=59 // pred_check
                _
              $region84: #{conditional_gru.1} parent=59 // pred_check_branch
                %2115 = sbr.rel target = $region86
              $region85: #{conditional_gru.1} parent=59 // pred_region
                _
              $region86: #{conditional_gru.1} parent=59 // pred_fallthru
                _
            $region60: #{conditional_gru.1} parent=55 // pred_fallthru
              _
            // Predicated region
            $region61: #{conditional_gru.1} parent=55 // pred_check
              _
            $region62: #{conditional_gru.1} parent=55 // pred_check_branch
              %2061 = sbr.rel target = $region64
            $region63: #{conditional_gru.1} parent=55 // pred_region
              %s2063 = ssub.s32 256, 1
              loop: start=0, step=1, limit=1
              $region65: #{conditional_gru.1} parent=63 // loop_pre_header
                _
              $region66: #{conditional_gru.1} parent=63 // loop_header
                %s2065 = sphi 0, %s2069
                %p2066 = scmp.ge.s32.totalorder %s2065, 1
                %s2070 = sphi %s2050, %s2050
                %s2071 = sphi %s2055, %s2055
              $region67: #{conditional_gru.1} parent=63 // loop_header_branch
                %2068 = sbr.rel (%p2066) target = $region71
              $region68: #{conditional_gru.1} parent=63 // loop_body
                %v2072 = vld [vmem:[%s2070] sm:%s2063]
                %2073 = vst [vmem:[%s2071] sm:%s2063] %v2072
                %v2074 = vld [vmem:[%s2070 + $0x8] sm:%s2063]
                %2075 = vst [vmem:[%s2071 + $0x10] sm:%s2063] %v2074
                %v2076 = vld [vmem:[%s2070 + $0x10] sm:%s2063]
                %2077 = vst [vmem:[%s2071 + $0x20] sm:%s2063] %v2076
                %v2078 = vld [vmem:[%s2070 + $0x18] sm:%s2063]
                %2079 = vst [vmem:[%s2071 + $0x30] sm:%s2063] %v2078
                %v2080 = vld [vmem:[%s2070 + $0x20] sm:%s2063]
                %2081 = vst [vmem:[%s2071 + $0x40] sm:%s2063] %v2080
                %v2082 = vld [vmem:[%s2070 + $0x28] sm:%s2063]
                %2083 = vst [vmem:[%s2071 + $0x50] sm:%s2063] %v2082
                %v2084 = vld [vmem:[%s2070 + $0x30] sm:%s2063]
                %2085 = vst [vmem:[%s2071 + $0x60] sm:%s2063] %v2084
                %v2086 = vld [vmem:[%s2070 + $0x38] sm:%s2063]
                %2087 = vst [vmem:[%s2071 + $0x70] sm:%s2063] %v2086
              $region69: #{conditional_gru.1} parent=63 // loop_footer
                %s2069 = sadd.s32 1, %s2065
              $region70: #{conditional_gru.1} parent=63 // loop_footer_branch
                %2064 = sbr.rel target = $region66
              $region71: #{conditional_gru.1} parent=63 // loop_exit
                _
            $region64: #{conditional_gru.1} parent=55 // pred_fallthru
              _
          $region56: #{conditional_gru.1} parent=51 // pred_fallthru
            _
          %2116 = vnop
        $region52: #{conditional_gru.1} parent=39 // pred_fallthru
          _
        // Predicated region
        $region87: #{conditional_gru.1} parent=39 // pred_check
          %p2117 = pneg %p167
        $region88: #{conditional_gru.1} parent=39 // pred_check_branch
          %2119 = sbr.rel (%p2117) target = $region90
        $region89: #{conditional_gru.1} parent=39 // pred_region
          _
        $region90: #{conditional_gru.1} parent=39 // pred_fallthru
          _
        // Predicated region
        $region91: #{conditional_gru.1} parent=39 // pred_check
          %p2120 = pneg %p167
        $region92: #{conditional_gru.1} parent=39 // pred_check_branch
          %2122 = sbr.rel (%p2120) target = $region94
        $region93: #{conditional_gru.1} parent=39 // pred_region
          _
        $region94: #{conditional_gru.1} parent=39 // pred_fallthru
          _
      $region40: #{conditional_gru.1} parent=5 // pred_fallthru
        _
      %p2123 = scmp.le.s32.totalorder 2, %s13
      // Predicated region
      $region95: #{conditional_gru.1} parent=5 // pred_check
        %p2124 = pneg %p2123
      $region96: #{conditional_gru.1} parent=5 // pred_check_branch
        %2126 = sbr.rel (%p2124) target = $region98
      $region97: #{conditional_gru.1} parent=5 // pred_region
        %s2127 = ssub.s32 %s13, 2
        // Predicated region
        $region99: #{conditional_gru.1} parent=97 // pred_check
          %p2128 = pneg %p152
        $region100: #{conditional_gru.1} parent=97 // pred_check_branch
          %2130 = sbr.rel (%p2128) target = $region102
        $region101: #{conditional_gru.1} parent=97 // pred_region
          %s2131 = sand.u32 %s137, 1
          %s2132 = sand.u32 %s137, 1
          %s2133 = smul.addr %s2132, 64
          %s2134 = scalar_lea.vmem [#allocation3], %s2133
        $region102: #{conditional_gru.1} parent=97 // pred_fallthru
          _
      $region98: #{conditional_gru.1} parent=5 // pred_fallthru
        _
    $region6: #{conditional_gru.1} parent=1 // loop_footer
      %s17 = sadd.s32 1, %s13
    $region7: #{conditional_gru.1} parent=1 // loop_footer_branch
      %12 = sbr.rel target = $region3
    $region8: #{conditional_gru.1} parent=1 // loop_exit
      _

</llo_original>
